<compile_context>
chip_gen: v7x
topology: tpu7x:2x2x1
jax: 0.10.0
libtpu: 0.0.40
codegen_flags: <defaults>
</compile_context>

<pallas_src>
import functools
import math

import jax
import jax.numpy as jnp
from jax.experimental import pallas as pl
from jax.experimental.pallas import tpu as pltpu

# ---------------- small LLaMA-style config ----------------
DIM = 64
N_HEADS = 4
N_KV_HEADS = 2
HEAD_DIM = DIM // N_HEADS            # 16
N_REP = N_HEADS // N_KV_HEADS        # 2
MULTIPLE_OF = 32
NORM_EPS = 1e-5
MAX_BATCH = 4
MAX_SEQ = 16

Q_DIM = N_HEADS * HEAD_DIM           # 64
KV_DIM = N_KV_HEADS * HEAD_DIM       # 32
QKV_DIM = Q_DIM + 2 * KV_DIM         # 128 -> lane-dense fused QKV output


def _ffn_hidden_dim(dim, multiple_of, ffn_dim_multiplier=None):
    hidden = 4 * dim
    hidden = int(2 * hidden / 3)
    if ffn_dim_multiplier is not None:
        hidden = int(ffn_dim_multiplier * hidden)
    return multiple_of * ((hidden + multiple_of - 1) // multiple_of)


HIDDEN_DIM = _ffn_hidden_dim(DIM, MULTIPLE_OF)   # 192


# ---------------- fused Pallas kernel (one grid step per batch row) ----------------
def _encoder_block_kernel(x_ref, an_ref, fn_ref, wqkv_ref, wo_ref, w13_ref,
                          w2_ref, cos_ref, sin_ref, ck_in_ref, cv_in_ref,
                          out_ref, ck_out_ref, cv_out_ref,
                          *, start_pos, seq_len, max_seq):
    S = seq_len
    x = x_ref[0]                                            # (S, D) f32

    # ---- RMSNorm (attention_norm), f32 on the VPU ----
    ms = jnp.mean(x * x, axis=-1, keepdims=True)
    xn = x * jax.lax.rsqrt(ms + NORM_EPS) * an_ref[...]

    # ---- fused QKV projection: single 128-lane MXU matmul (bf16 in, f32 acc) ----
    qkv = jnp.dot(xn.astype(jnp.bfloat16), wqkv_ref[...],
                  preferred_element_type=jnp.float32)       # (S, 128)

    # ---- interleaved RoPE via XLU lane rolls (no permutation matmul) ----
    # rot(x)[2i] = x[2i+1], rot(x)[2i+1] = x[2i]; the +/- sign is folded into
    # the precomputed sin table (V lanes have cos=1, sin=0 -> pass-through).
    rolled_up = pltpu.roll(qkv, QKV_DIM - 1, 1)             # lane j <- lane j+1
    rolled_dn = pltpu.roll(qkv, 1, 1)                       # lane j <- lane j-1
    lane = jax.lax.broadcasted_iota(jnp.int32, (S, QKV_DIM), 1)
    rot = jnp.where(lane % 2 == 0, rolled_up, rolled_dn)
    roped = qkv * cos_ref[...] + rot * sin_ref[...]         # (S, 128)

    q = roped[:, :Q_DIM]                                    # (S, 64)
    k_new = roped[:, Q_DIM:Q_DIM + KV_DIM]                  # (S, 32)
    v_new = qkv[:, Q_DIM + KV_DIM:]                         # (S, 32)

    # ---- KV-cache write-through (output aliased to the input cache) ----
    ck_out_ref[0] = ck_in_ref[0]
    cv_out_ref[0] = cv_in_ref[0]
    ck_out_ref[0, start_pos:start_pos + S, :] = k_new
    cv_out_ref[0, start_pos:start_pos + S, :] = v_new
    keys = ck_out_ref[0]                                    # (MAX_SEQ, 32)
    vals = cv_out_ref[0]

    # ---- attention: GQA by slicing the shared KV head (no jnp.repeat) ----
    scale = 1.0 / math.sqrt(HEAD_DIM)
    col = jax.lax.broadcasted_iota(jnp.int32, (S, max_seq), 1)
    valid = col < (start_pos + S)                           # mask unused cache rows
    k_bf = keys.astype(jnp.bfloat16)
    v_bf = vals.astype(jnp.bfloat16)
    head_outs = []
    for h in range(N_HEADS):                                # static unroll (4 heads)
        g = h // N_REP
        qh = q[:, h * HEAD_DIM:(h + 1) * HEAD_DIM].astype(jnp.bfloat16)
        kh = k_bf[:, g * HEAD_DIM:(g + 1) * HEAD_DIM]
        vh = v_bf[:, g * HEAD_DIM:(g + 1) * HEAD_DIM]
        s = jax.lax.dot_general(qh, kh, (((1,), (1,)), ((), ())),
                                preferred_element_type=jnp.float32) * scale
        s = jnp.where(valid, s, -1e30)
        m = jnp.max(s, axis=-1, keepdims=True)
        e = jnp.exp(s - m)
        p = e * pl.reciprocal(jnp.sum(e, axis=-1, keepdims=True), approx=True)
        head_outs.append(jnp.dot(p.astype(jnp.bfloat16), vh,
                                 preferred_element_type=jnp.float32))
    attn = jnp.concatenate(head_outs, axis=-1)              # (S, 64)

    # ---- output projection + residual ----
    h1 = x + jnp.dot(attn.astype(jnp.bfloat16), wo_ref[...],
                     preferred_element_type=jnp.float32)

    # ---- RMSNorm (ffn_norm) + SwiGLU FFN (fused w1|w3) + residual ----
    ms2 = jnp.mean(h1 * h1, axis=-1, keepdims=True)
    hn = h1 * jax.lax.rsqrt(ms2 + NORM_EPS) * fn_ref[...]
    u = jnp.dot(hn.astype(jnp.bfloat16), w13_ref[...],
                preferred_element_type=jnp.float32)         # (S, 2*HIDDEN)
    a = u[:, :HIDDEN_DIM]
    b = u[:, HIDDEN_DIM:]
    gated = a * jax.nn.sigmoid(a) * b
    out_ref[0] = h1 + jnp.dot(gated.astype(jnp.bfloat16), w2_ref[...],
                              preferred_element_type=jnp.float32)


# ---------------- one-time parameter / RoPE-table preparation ----------------
def prepare_params(params):
    """Fuse & cast weights once (hoist out of the per-step path)."""
    cast = lambda w: w.astype(jnp.bfloat16)
    return {
        "attn_norm_w": params["attn_norm_w"].reshape(1, DIM).astype(jnp.float32),
        "ffn_norm_w": params["ffn_norm_w"].reshape(1, DIM).astype(jnp.float32),
        "wqkv": cast(jnp.concatenate(
            [params["wq_t"], params["wk_t"], params["wv_t"]], axis=1)),   # (D,128)
        "wo": cast(params["wo_t"]),                                       # (64,D)
        "w13": cast(jnp.concatenate(
            [params["w1_t"], params["w3_t"]], axis=1)),                   # (D,384)
        "w2": cast(params["w2_t"]),                                       # (192,D)
    }


def prepare_rope_tables(cos_half, sin_half):
    """Lane-dense (S, 128) cos / signed-sin tables covering [Q | K | V] lanes."""
    S = cos_half.shape[0]
    cos_i = jnp.repeat(cos_half, 2, axis=-1)                 # (S, hd) interleaved
    sin_i = jnp.repeat(sin_half, 2, axis=-1)
    sign = jnp.tile(jnp.array([-1.0, 1.0], jnp.float32), HEAD_DIM // 2)
    sin_signed = sin_i * sign[None, :]                       # -sin on even lanes
    cos_q = jnp.tile(cos_i, (1, N_HEADS))
    sin_q = jnp.tile(sin_signed, (1, N_HEADS))
    cos_k = jnp.tile(cos_i, (1, N_KV_HEADS))
    sin_k = jnp.tile(sin_signed, (1, N_KV_HEADS))
    cos_v = jnp.ones((S, KV_DIM), jnp.float32)               # V lanes untouched
    sin_v = jnp.zeros((S, KV_DIM), jnp.float32)
    cos_tab = jnp.concatenate([cos_q, cos_k, cos_v], axis=-1)  # (S, 128)
    sin_tab = jnp.concatenate([sin_q, sin_k, sin_v], axis=-1)
    return cos_tab, sin_tab


# ---------------- EncoderBlock forward (single pallas_call) ----------------
def encoder_block(x, prepped, start_pos, cos_tab, sin_tab, cache_k, cache_v):
    """start_pos must be a static Python int (as in the torch reference).
    The torch module mutates its caches in place; here the updated caches are
    returned functionally but the HBM buffers are aliased in-place via
    input_output_aliases (under jit with donated caches there is no copy)."""
    # TODO(synk): true in-place nn.Module buffer mutation has no functional JAX
    # equivalent; the aliased cache outputs are the closest match.
    B, S, D = x.shape
    MB, MS, NKV, HD = cache_k.shape
    ck = cache_k.reshape(MB, MS, NKV * HD)
    cv = cache_v.reshape(MB, MS, NKV * HD)

    kernel = functools.partial(_encoder_block_kernel,
                               start_pos=start_pos, seq_len=S, max_seq=MS)
    full = lambda b: (0, 0)
    per_b = lambda b: (b, 0, 0)

    out, new_ck, new_cv = pl.pallas_call(
        kernel,
        out_shape=(
            jax.ShapeDtypeStruct((B, S, D), jnp.float32),
            jax.ShapeDtypeStruct((MB, MS, NKV * HD), jnp.float32),
            jax.ShapeDtypeStruct((MB, MS, NKV * HD), jnp.float32),
        ),
        grid=(B,),
        in_specs=[
            pl.BlockSpec((1, S, D), per_b),              # x
            pl.BlockSpec((1, D), full),                  # attention_norm weight
            pl.BlockSpec((1, D), full),                  # ffn_norm weight
            pl.BlockSpec((D, QKV_DIM), full),            # fused Wq|Wk|Wv (bf16)
            pl.BlockSpec((Q_DIM, D), full),              # Wo (bf16)
            pl.BlockSpec((D, 2 * HIDDEN_DIM), full),     # fused w1|w3 (bf16)
            pl.BlockSpec((HIDDEN_DIM, D), full),         # w2 (bf16)
            pl.BlockSpec((S, QKV_DIM), full),            # RoPE cos table
            pl.BlockSpec((S, QKV_DIM), full),            # RoPE signed-sin table
            pl.BlockSpec((1, MS, NKV * HD), per_b),      # cache_k (in)
            pl.BlockSpec((1, MS, NKV * HD), per_b),      # cache_v (in)
        ],
        out_specs=(
            pl.BlockSpec((1, S, D), per_b),
            pl.BlockSpec((1, MS, NKV * HD), per_b),
            pl.BlockSpec((1, MS, NKV * HD), per_b),
        ),
        input_output_aliases={9: 1, 10: 2},
        compiler_params=pltpu.CompilerParams(
            dimension_semantics=("parallel",)),
    )(x, prepped["attn_norm_w"], prepped["ffn_norm_w"], prepped["wqkv"],
      prepped["wo"], prepped["w13"], prepped["w2"], cos_tab, sin_tab, ck, cv)

    return out, new_ck.reshape(MB, MS, NKV, HD), new_cv.reshape(MB, MS, NKV, HD)


# ---------------- pure-JAX f32 reference (mirrors the torch forward) ----------------
def reference_encoder_block(x, params, start_pos, cos_half, sin_half,
                            cache_k, cache_v):
    def rmsnorm(t, w):
        return w * (t * jax.lax.rsqrt(
            jnp.mean(t * t, axis=-1, keepdims=True) + NORM_EPS))

    B, S, D = x.shape
    xn = rmsnorm(x, params["attn_norm_w"])
    xq = (xn @ params["wq_t"]).reshape(B, S, N_HEADS, HEAD_DIM)
    xk = (xn @ params["wk_t"]).reshape(B, S, N_KV_HEADS, HEAD_DIM)
    xv = (xn @ params["wv_t"]).reshape(B, S, N_KV_HEADS, HEAD_DIM)

    def rope(t):
        tr = t.reshape(*t.shape[:-1], HEAD_DIM // 2, 2)
        re, im = tr[..., 0], tr[..., 1]
        c = cos_half[None, :, None, :]
        s = sin_half[None, :, None, :]
        return jnp.stack([re * c - im * s, re * s + im * c], axis=-1).reshape(t.shape)

    xq, xk = rope(xq), rope(xk)
    cache_k = jax.lax.dynamic_update_slice(cache_k, xk, (0, start_pos, 0, 0))
    cache_v = jax.lax.dynamic_update_slice(cache_v, xv, (0, start_pos, 0, 0))
    T = start_pos + S
    keys = jnp.repeat(cache_k[:B, :T], N_REP, axis=2)
    values = jnp.repeat(cache_v[:B, :T], N_REP, axis=2)

    q = xq.transpose(0, 2, 1, 3)
    k = keys.transpose(0, 2, 1, 3)
    v = values.transpose(0, 2, 1, 3)
    scores = (q @ k.transpose(0, 1, 3, 2)) / math.sqrt(HEAD_DIM)
    scores = jax.nn.softmax(scores, axis=-1)
    attn = (scores @ v).transpose(0, 2, 1, 3).reshape(B, S, -1)
    h = x + attn @ params["wo_t"]

    hn = rmsnorm(h, params["ffn_norm_w"])
    a = hn @ params["w1_t"]
    b = hn @ params["w3_t"]
    out = h + (a * jax.nn.sigmoid(a) * b) @ params["w2_t"]
    return out, cache_k, cache_v


# ---------------- main ----------------
if __name__ == "__main__":
    B, S = 2, 8
    start_pos = 3

    key = jax.random.PRNGKey(0)
    keys = jax.random.split(key, 8)
    init = lambda k, shape: 0.02 * jax.random.normal(k, shape, dtype=jnp.float32)

    params = {
        "attn_norm_w": jnp.ones((DIM,), jnp.float32),
        "ffn_norm_w": jnp.ones((DIM,), jnp.float32),
        "wq_t": init(keys[0], (DIM, N_HEADS * HEAD_DIM)),
        "wk_t": init(keys[1], (DIM, N_KV_HEADS * HEAD_DIM)),
        "wv_t": init(keys[2], (DIM, N_KV_HEADS * HEAD_DIM)),
        "wo_t": init(keys[3], (N_HEADS * HEAD_DIM, DIM)),
        "w1_t": init(keys[4], (DIM, HIDDEN_DIM)),
        "w2_t": init(keys[5], (HIDDEN_DIM, DIM)),
        "w3_t": init(keys[6], (DIM, HIDDEN_DIM)),
    }
    x = jax.random.normal(keys[7], (B, S, DIM), dtype=jnp.float32)

    # freqs for positions [start_pos, start_pos+S) -> cos/sin halves (S, hd/2)
    inv_freq = 1.0 / (10000.0 ** (
        jnp.arange(0, HEAD_DIM, 2, dtype=jnp.float32) / HEAD_DIM))
    pos = jnp.arange(start_pos, start_pos + S, dtype=jnp.float32)
    angles = jnp.outer(pos, inv_freq)
    cos_half, sin_half = jnp.cos(angles), jnp.sin(angles)

    cache_k = jnp.zeros((MAX_BATCH, MAX_SEQ, N_KV_HEADS, HEAD_DIM), jnp.float32)
    cache_v = jnp.zeros((MAX_BATCH, MAX_SEQ, N_KV_HEADS, HEAD_DIM), jnp.float32)

    # f32 reference (computed first; kernel path may alias/overwrite caches)
    ref_out, ref_ck, ref_cv = reference_encoder_block(
        x, params, start_pos, cos_half, sin_half, cache_k, cache_v)
    ref_out = jax.block_until_ready(ref_out)

    # one-time prep (fused/cast weights + lane-dense RoPE tables)
    prepped = prepare_params(params)
    cos_tab, sin_tab = prepare_rope_tables(cos_half, sin_half)

    out, new_ck, new_cv = encoder_block(
        x, prepped, start_pos, cos_tab, sin_tab, cache_k, cache_v)
    out = jax.block_until_ready(out)

    assert out.shape == (B, S, DIM)
    # bf16 MXU operands + approx reciprocal -> slightly looser tolerance vs f32 ref
    assert jnp.allclose(out, ref_out, rtol=2e-2, atol=2e-2), (
        float(jnp.max(jnp.abs(out - ref_out))))
    assert jnp.allclose(new_ck, ref_ck, rtol=2e-2, atol=2e-2), (
        float(jnp.max(jnp.abs(new_ck - ref_ck))))
    assert jnp.allclose(new_cv, ref_cv, rtol=2e-2, atol=2e-2), (
        float(jnp.max(jnp.abs(new_cv - ref_cv))))
    print("KERNEL_OK")
</pallas_src>

<mosaic_0001>
module attributes {stable_mosaic.version = 11 : i64} {
  func.func @_encoder_block_kernel(%arg0: i32, %arg1: memref<1x8x64xf32, #tpu.memory_space<vmem>>, %arg2: memref<1x64xf32, #tpu.memory_space<vmem>>, %arg3: memref<1x64xf32, #tpu.memory_space<vmem>>, %arg4: memref<64x128xbf16, #tpu.memory_space<vmem>>, %arg5: memref<64x64xbf16, #tpu.memory_space<vmem>>, %arg6: memref<64x384xbf16, #tpu.memory_space<vmem>>, %arg7: memref<192x64xbf16, #tpu.memory_space<vmem>>, %arg8: memref<8x128xf32, #tpu.memory_space<vmem>>, %arg9: memref<8x128xf32, #tpu.memory_space<vmem>>, %arg10: memref<1x16x32xf32, #tpu.memory_space<vmem>>, %arg11: memref<1x16x32xf32, #tpu.memory_space<vmem>>, %arg12: memref<1x8x64xf32, #tpu.memory_space<vmem>>, %arg13: memref<1x16x32xf32, #tpu.memory_space<vmem>>, %arg14: memref<1x16x32xf32, #tpu.memory_space<vmem>>) attributes {dimension_semantics = [#tpu.dimension_semantics<parallel>], iteration_bounds = array<i64: 2>, scalar_prefetch = 0 : i64, scratch_operands = 0 : i64, tpu.core_type = #tpu.core_type<tc>, window_params = [{transform_indices = @transform_0, window_bounds = array<i64: 1, 8, 64>}, {pipeline_mode = #tpu.pipeline_mode<synchronous>, transform_indices = @transform_1, window_bounds = array<i64: 1, 64>}, {pipeline_mode = #tpu.pipeline_mode<synchronous>, transform_indices = @transform_2, window_bounds = array<i64: 1, 64>}, {pipeline_mode = #tpu.pipeline_mode<synchronous>, transform_indices = @transform_3, window_bounds = array<i64: 64, 128>}, {pipeline_mode = #tpu.pipeline_mode<synchronous>, transform_indices = @transform_4, window_bounds = array<i64: 64, 64>}, {pipeline_mode = #tpu.pipeline_mode<synchronous>, transform_indices = @transform_5, window_bounds = array<i64: 64, 384>}, {pipeline_mode = #tpu.pipeline_mode<synchronous>, transform_indices = @transform_6, window_bounds = array<i64: 192, 64>}, {pipeline_mode = #tpu.pipeline_mode<synchronous>, transform_indices = @transform_7, window_bounds = array<i64: 8, 128>}, {pipeline_mode = #tpu.pipeline_mode<synchronous>, transform_indices = @transform_8, window_bounds = array<i64: 8, 128>}, {transform_indices = @transform_9, window_bounds = array<i64: 1, 16, 32>}, {transform_indices = @transform_10, window_bounds = array<i64: 1, 16, 32>}, {transform_indices = @transform_11, window_bounds = array<i64: 1, 8, 64>}, {transform_indices = @transform_12, window_bounds = array<i64: 1, 16, 32>}, {transform_indices = @transform_13, window_bounds = array<i64: 1, 16, 32>}]} {
    %c0 = arith.constant 0 : index
    %c0_0 = arith.constant 0 : index
    %c0_1 = arith.constant 0 : index
    %0 = vector.load %arg1[%c0, %c0_0, %c0_1] : memref<1x8x64xf32, #tpu.memory_space<vmem>>, vector<1x8x64xf32>
    %1 = vector.shape_cast %0 : vector<1x8x64xf32> to vector<8x64xf32>
    %2 = arith.mulf %1, %1 : vector<8x64xf32>
    %cst = arith.constant dense<0.000000e+00> : vector<8xf32>
    %3 = vector.multi_reduction <add>, %2, %cst [1] : vector<8x64xf32> to vector<8xf32>
    %4 = vector.shape_cast %3 : vector<8xf32> to vector<8x1xf32>
    %cst_2 = arith.constant 6.400000e+01 : f32
    %5 = vector.broadcast %cst_2 : f32 to vector<8x1xf32>
    %6 = arith.divf %4, %5 : vector<8x1xf32>
    %cst_3 = arith.constant 9.99999974E-6 : f32
    %7 = vector.broadcast %cst_3 : f32 to vector<8x1xf32>
    %8 = arith.addf %6, %7 : vector<8x1xf32>
    %9 = math.rsqrt %8 : vector<8x1xf32>
    %10 = vector.broadcast %9 : vector<8x1xf32> to vector<8x64xf32>
    %11 = arith.mulf %1, %10 : vector<8x64xf32>
    %c0_4 = arith.constant 0 : index
    %c0_5 = arith.constant 0 : index
    %12 = vector.load %arg2[%c0_4, %c0_5] : memref<1x64xf32, #tpu.memory_space<vmem>>, vector<1x64xf32>
    %13 = vector.broadcast %12 : vector<1x64xf32> to vector<8x64xf32>
    %14 = arith.mulf %11, %13 : vector<8x64xf32>
    %15 = arith.truncf %14 : vector<8x64xf32> to vector<8x64xbf16>
    %c0_6 = arith.constant 0 : index
    %c0_7 = arith.constant 0 : index
    %16 = vector.load %arg4[%c0_6, %c0_7] : memref<64x128xbf16, #tpu.memory_space<vmem>>, vector<64x128xbf16>
    %cst_8 = arith.constant dense<0.000000e+00> : vector<8x128xf32>
    %17 = tpu.matmul %15, %16, %cst_8 {dimension_numbers = #tpu.dot_dimension_numbers<[1], [0], [0], [1], [0, 0, 1, 1], [], []>} : vector<8x64xbf16>, vector<64x128xbf16>, vector<8x128xf32> -> vector<8x128xf32>
    %c127_i32 = arith.constant 127 : i32
    %18 = tpu.dynamic_rotate %17 by %c127_i32 dim 1 : vector<8x128xf32>, i32 -> vector<8x128xf32>
    %c1_i32 = arith.constant 1 : i32
    %19 = tpu.dynamic_rotate %17 by %c1_i32 dim 1 : vector<8x128xf32>, i32 -> vector<8x128xf32>
    %20 = tpu.iota {dimensions = array<i32: 1>} : vector<8x128xi32>
    %c2_i32 = arith.constant 2 : i32
    %c0_i32 = arith.constant 0 : i32
    %21 = arith.cmpi eq, %c2_i32, %c0_i32 : i32
    %c1_i32_9 = arith.constant 1 : i32
    %22 = arith.select %21, %c1_i32_9, %c2_i32 : i32
    %23 = vector.broadcast %22 : i32 to vector<8x128xi32>
    %24 = arith.remsi %20, %23 : vector<8x128xi32>
    %c0_i32_10 = arith.constant 0 : i32
    %25 = vector.broadcast %c0_i32_10 : i32 to vector<8x128xi32>
    %26 = arith.cmpi ne, %24, %25 : vector<8x128xi32>
    %c0_i32_11 = arith.constant 0 : i32
    %27 = vector.broadcast %c0_i32_11 : i32 to vector<8x128xi32>
    %28 = arith.cmpi slt, %24, %27 : vector<8x128xi32>
    %c0_i32_12 = arith.constant 0 : i32
    %29 = arith.cmpi slt, %22, %c0_i32_12 : i32
    %30 = vector.broadcast %29 : i1 to vector<8x128xi1>
    %31 = vector.broadcast %30 : vector<8x128xi1> to vector<8x128xi1>
    %32 = arith.xori %28, %31 : vector<8x128xi1>
    %33 = arith.andi %32, %26 : vector<8x128xi1>
    %34 = vector.broadcast %22 : i32 to vector<8x128xi32>
    %35 = arith.addi %24, %34 : vector<8x128xi32>
    %36 = arith.select %33, %35, %24 : vector<8x128xi1>, vector<8x128xi32>
    %c0_i32_13 = arith.constant 0 : i32
    %37 = vector.broadcast %c0_i32_13 : i32 to vector<8x128xi32>
    %38 = arith.cmpi eq, %36, %37 : vector<8x128xi32>
    %39 = arith.select %38, %18, %19 : vector<8x128xi1>, vector<8x128xf32>
    %c0_14 = arith.constant 0 : index
    %c0_15 = arith.constant 0 : index
    %40 = vector.load %arg8[%c0_14, %c0_15] : memref<8x128xf32, #tpu.memory_space<vmem>>, vector<8x128xf32>
    %41 = arith.mulf %17, %40 : vector<8x128xf32>
    %c0_16 = arith.constant 0 : index
    %c0_17 = arith.constant 0 : index
    %42 = vector.load %arg9[%c0_16, %c0_17] : memref<8x128xf32, #tpu.memory_space<vmem>>, vector<8x128xf32>
    %43 = arith.mulf %39, %42 : vector<8x128xf32>
    %44 = arith.addf %41, %43 : vector<8x128xf32>
    %45 = vector.extract_strided_slice %44 {offsets = [0, 0], sizes = [8, 64], strides = [1, 1]} : vector<8x128xf32> to vector<8x64xf32>
    %46 = vector.extract_strided_slice %44 {offsets = [0, 64], sizes = [8, 32], strides = [1, 1]} : vector<8x128xf32> to vector<8x32xf32>
    %47 = vector.extract_strided_slice %17 {offsets = [0, 96], sizes = [8, 32], strides = [1, 1]} : vector<8x128xf32> to vector<8x32xf32>
    %c0_18 = arith.constant 0 : index
    %c0_19 = arith.constant 0 : index
    %c0_20 = arith.constant 0 : index
    %48 = vector.load %arg10[%c0_18, %c0_19, %c0_20] : memref<1x16x32xf32, #tpu.memory_space<vmem>>, vector<1x16x32xf32>
    %49 = vector.shape_cast %48 : vector<1x16x32xf32> to vector<16x32xf32>
    %c0_21 = arith.constant 0 : index
    %c0_22 = arith.constant 0 : index
    %c0_23 = arith.constant 0 : index
    %50 = vector.load %arg13[%c0_21, %c0_22, %c0_23] : memref<1x16x32xf32, #tpu.memory_space<vmem>>, vector<1x16x32xf32>
    %51 = vector.shape_cast %50 : vector<1x16x32xf32> to vector<16x32xf32>
    %52 = vector.shape_cast %49 : vector<16x32xf32> to vector<1x16x32xf32>
    tpu.vector_store %arg13[%c0_21, %c0_22, %c0_23], %52 {strides = array<i32>} : memref<1x16x32xf32, #tpu.memory_space<vmem>>, vector<1x16x32xf32>,
    %c0_24 = arith.constant 0 : index
    %c0_25 = arith.constant 0 : index
    %c0_26 = arith.constant 0 : index
    %53 = vector.load %arg11[%c0_24, %c0_25, %c0_26] : memref<1x16x32xf32, #tpu.memory_space<vmem>>, vector<1x16x32xf32>
    %54 = vector.shape_cast %53 : vector<1x16x32xf32> to vector<16x32xf32>
    %c0_27 = arith.constant 0 : index
    %c0_28 = arith.constant 0 : index
    %c0_29 = arith.constant 0 : index
    %55 = vector.load %arg14[%c0_27, %c0_28, %c0_29] : memref<1x16x32xf32, #tpu.memory_space<vmem>>, vector<1x16x32xf32>
    %56 = vector.shape_cast %55 : vector<1x16x32xf32> to vector<16x32xf32>
    %57 = vector.shape_cast %54 : vector<16x32xf32> to vector<1x16x32xf32>
    tpu.vector_store %arg14[%c0_27, %c0_28, %c0_29], %57 {strides = array<i32>} : memref<1x16x32xf32, #tpu.memory_space<vmem>>, vector<1x16x32xf32>,
    %c0_30 = arith.constant 0 : index
    %c3 = arith.constant 3 : index
    %c0_31 = arith.constant 0 : index
    %58 = vector.load %arg13[%c0_30, %c3, %c0_31] : memref<1x16x32xf32, #tpu.memory_space<vmem>>, vector<1x8x32xf32>
    %59 = vector.shape_cast %58 : vector<1x8x32xf32> to vector<8x32xf32>
    %60 = vector.shape_cast %46 : vector<8x32xf32> to vector<1x8x32xf32>
    tpu.vector_store %arg13[%c0_30, %c3, %c0_31], %60 {strides = array<i32>} : memref<1x16x32xf32, #tpu.memory_space<vmem>>, vector<1x8x32xf32>,
    %c0_32 = arith.constant 0 : index
    %c3_33 = arith.constant 3 : index
    %c0_34 = arith.constant 0 : index
    %61 = vector.load %arg14[%c0_32, %c3_33, %c0_34] : memref<1x16x32xf32, #tpu.memory_space<vmem>>, vector<1x8x32xf32>
    %62 = vector.shape_cast %61 : vector<1x8x32xf32> to vector<8x32xf32>
    %63 = vector.shape_cast %47 : vector<8x32xf32> to vector<1x8x32xf32>
    tpu.vector_store %arg14[%c0_32, %c3_33, %c0_34], %63 {strides = array<i32>} : memref<1x16x32xf32, #tpu.memory_space<vmem>>, vector<1x8x32xf32>,
    %c0_35 = arith.constant 0 : index
    %c0_36 = arith.constant 0 : index
    %c0_37 = arith.constant 0 : index
    %64 = vector.load %arg13[%c0_35, %c0_36, %c0_37] : memref<1x16x32xf32, #tpu.memory_space<vmem>>, vector<1x16x32xf32>
    %65 = vector.shape_cast %64 : vector<1x16x32xf32> to vector<16x32xf32>
    %c0_38 = arith.constant 0 : index
    %c0_39 = arith.constant 0 : index
    %c0_40 = arith.constant 0 : index
    %66 = vector.load %arg14[%c0_38, %c0_39, %c0_40] : memref<1x16x32xf32, #tpu.memory_space<vmem>>, vector<1x16x32xf32>
    %67 = vector.shape_cast %66 : vector<1x16x32xf32> to vector<16x32xf32>
    %68 = tpu.iota {dimensions = array<i32: 1>} : vector<8x16xi32>
    %c11_i32 = arith.constant 11 : i32
    %69 = vector.broadcast %c11_i32 : i32 to vector<8x16xi32>
    %70 = arith.cmpi slt, %68, %69 : vector<8x16xi32>
    %71 = arith.truncf %65 : vector<16x32xf32> to vector<16x32xbf16>
    %72 = arith.truncf %67 : vector<16x32xf32> to vector<16x32xbf16>
    %73 = vector.extract_strided_slice %45 {offsets = [0, 0], sizes = [8, 16], strides = [1, 1]} : vector<8x64xf32> to vector<8x16xf32>
    %74 = arith.truncf %73 : vector<8x16xf32> to vector<8x16xbf16>
    %75 = vector.extract_strided_slice %71 {offsets = [0, 0], sizes = [16, 16], strides = [1, 1]} : vector<16x32xbf16> to vector<16x16xbf16>
    %76 = vector.extract_strided_slice %72 {offsets = [0, 0], sizes = [16, 16], strides = [1, 1]} : vector<16x32xbf16> to vector<16x16xbf16>
    %cst_41 = arith.constant dense<0.000000e+00> : vector<8x16xf32>
    %77 = tpu.matmul %74, %75, %cst_41 {dimension_numbers = #tpu.dot_dimension_numbers<[1], [1], [0], [0], [0, 0, 1, 0], [], []>} : vector<8x16xbf16>, vector<16x16xbf16>, vector<8x16xf32> -> vector<8x16xf32>
    %cst_42 = arith.constant 2.500000e-01 : f32
    %78 = vector.broadcast %cst_42 : f32 to vector<8x16xf32>
    %79 = arith.mulf %77, %78 : vector<8x16xf32>
    %cst_43 = arith.constant -1.000000e+30 : f32
    %80 = vector.broadcast %cst_43 : f32 to vector<8x16xf32>
    %81 = arith.select %70, %79, %80 : vector<8x16xi1>, vector<8x16xf32>
    %cst_44 = arith.constant dense<0xFF800000> : vector<8xf32>
    %82 = vector.multi_reduction <maximumf>, %81, %cst_44 [1] : vector<8x16xf32> to vector<8xf32>
    %83 = vector.shape_cast %82 : vector<8xf32> to vector<8x1xf32>
    %84 = vector.broadcast %83 : vector<8x1xf32> to vector<8x16xf32>
    %85 = arith.subf %81, %84 : vector<8x16xf32>
    %86 = math.exp %85 : vector<8x16xf32>
    %cst_45 = arith.constant dense<0.000000e+00> : vector<8xf32>
    %87 = vector.multi_reduction <add>, %86, %cst_45 [1] : vector<8x16xf32> to vector<8xf32>
    %88 = vector.shape_cast %87 : vector<8xf32> to vector<8x1xf32>
    %89 = tpu.reciprocal %88 {approx = true} : vector<8x1xf32> -> vector<8x1xf32>
    %90 = vector.broadcast %89 : vector<8x1xf32> to vector<8x16xf32>
    %91 = arith.mulf %86, %90 : vector<8x16xf32>
    %92 = arith.truncf %91 : vector<8x16xf32> to vector<8x16xbf16>
    %cst_46 = arith.constant dense<0.000000e+00> : vector<8x16xf32>
    %93 = tpu.matmul %92, %76, %cst_46 {dimension_numbers = #tpu.dot_dimension_numbers<[1], [0], [0], [1], [0, 0, 1, 1], [], []>} : vector<8x16xbf16>, vector<16x16xbf16>, vector<8x16xf32> -> vector<8x16xf32>
    %94 = vector.extract_strided_slice %45 {offsets = [0, 16], sizes = [8, 16], strides = [1, 1]} : vector<8x64xf32> to vector<8x16xf32>
    %95 = arith.truncf %94 : vector<8x16xf32> to vector<8x16xbf16>
    %96 = vector.extract_strided_slice %71 {offsets = [0, 0], sizes = [16, 16], strides = [1, 1]} : vector<16x32xbf16> to vector<16x16xbf16>
    %97 = vector.extract_strided_slice %72 {offsets = [0, 0], sizes = [16, 16], strides = [1, 1]} : vector<16x32xbf16> to vector<16x16xbf16>
    %cst_47 = arith.constant dense<0.000000e+00> : vector<8x16xf32>
    %98 = tpu.matmul %95, %96, %cst_47 {dimension_numbers = #tpu.dot_dimension_numbers<[1], [1], [0], [0], [0, 0, 1, 0], [], []>} : vector<8x16xbf16>, vector<16x16xbf16>, vector<8x16xf32> -> vector<8x16xf32>
    %cst_48 = arith.constant 2.500000e-01 : f32
    %99 = vector.broadcast %cst_48 : f32 to vector<8x16xf32>
    %100 = arith.mulf %98, %99 : vector<8x16xf32>
    %cst_49 = arith.constant -1.000000e+30 : f32
    %101 = vector.broadcast %cst_49 : f32 to vector<8x16xf32>
    %102 = arith.select %70, %100, %101 : vector<8x16xi1>, vector<8x16xf32>
    %cst_50 = arith.constant dense<0xFF800000> : vector<8xf32>
    %103 = vector.multi_reduction <maximumf>, %102, %cst_50 [1] : vector<8x16xf32> to vector<8xf32>
    %104 = vector.shape_cast %103 : vector<8xf32> to vector<8x1xf32>
    %105 = vector.broadcast %104 : vector<8x1xf32> to vector<8x16xf32>
    %106 = arith.subf %102, %105 : vector<8x16xf32>
    %107 = math.exp %106 : vector<8x16xf32>
    %cst_51 = arith.constant dense<0.000000e+00> : vector<8xf32>
    %108 = vector.multi_reduction <add>, %107, %cst_51 [1] : vector<8x16xf32> to vector<8xf32>
    %109 = vector.shape_cast %108 : vector<8xf32> to vector<8x1xf32>
    %110 = tpu.reciprocal %109 {approx = true} : vector<8x1xf32> -> vector<8x1xf32>
    %111 = vector.broadcast %110 : vector<8x1xf32> to vector<8x16xf32>
    %112 = arith.mulf %107, %111 : vector<8x16xf32>
    %113 = arith.truncf %112 : vector<8x16xf32> to vector<8x16xbf16>
    %cst_52 = arith.constant dense<0.000000e+00> : vector<8x16xf32>
    %114 = tpu.matmul %113, %97, %cst_52 {dimension_numbers = #tpu.dot_dimension_numbers<[1], [0], [0], [1], [0, 0, 1, 1], [], []>} : vector<8x16xbf16>, vector<16x16xbf16>, vector<8x16xf32> -> vector<8x16xf32>
    %115 = vector.extract_strided_slice %45 {offsets = [0, 32], sizes = [8, 16], strides = [1, 1]} : vector<8x64xf32> to vector<8x16xf32>
    %116 = arith.truncf %115 : vector<8x16xf32> to vector<8x16xbf16>
    %117 = vector.extract_strided_slice %71 {offsets = [0, 16], sizes = [16, 16], strides = [1, 1]} : vector<16x32xbf16> to vector<16x16xbf16>
    %118 = vector.extract_strided_slice %72 {offsets = [0, 16], sizes = [16, 16], strides = [1, 1]} : vector<16x32xbf16> to vector<16x16xbf16>
    %cst_53 = arith.constant dense<0.000000e+00> : vector<8x16xf32>
    %119 = tpu.matmul %116, %117, %cst_53 {dimension_numbers = #tpu.dot_dimension_numbers<[1], [1], [0], [0], [0, 0, 1, 0], [], []>} : vector<8x16xbf16>, vector<16x16xbf16>, vector<8x16xf32> -> vector<8x16xf32>
    %cst_54 = arith.constant 2.500000e-01 : f32
    %120 = vector.broadcast %cst_54 : f32 to vector<8x16xf32>
    %121 = arith.mulf %119, %120 : vector<8x16xf32>
    %cst_55 = arith.constant -1.000000e+30 : f32
    %122 = vector.broadcast %cst_55 : f32 to vector<8x16xf32>
    %123 = arith.select %70, %121, %122 : vector<8x16xi1>, vector<8x16xf32>
    %cst_56 = arith.constant dense<0xFF800000> : vector<8xf32>
    %124 = vector.multi_reduction <maximumf>, %123, %cst_56 [1] : vector<8x16xf32> to vector<8xf32>
    %125 = vector.shape_cast %124 : vector<8xf32> to vector<8x1xf32>
    %126 = vector.broadcast %125 : vector<8x1xf32> to vector<8x16xf32>
    %127 = arith.subf %123, %126 : vector<8x16xf32>
    %128 = math.exp %127 : vector<8x16xf32>
    %cst_57 = arith.constant dense<0.000000e+00> : vector<8xf32>
    %129 = vector.multi_reduction <add>, %128, %cst_57 [1] : vector<8x16xf32> to vector<8xf32>
    %130 = vector.shape_cast %129 : vector<8xf32> to vector<8x1xf32>
    %131 = tpu.reciprocal %130 {approx = true} : vector<8x1xf32> -> vector<8x1xf32>
    %132 = vector.broadcast %131 : vector<8x1xf32> to vector<8x16xf32>
    %133 = arith.mulf %128, %132 : vector<8x16xf32>
    %134 = arith.truncf %133 : vector<8x16xf32> to vector<8x16xbf16>
    %cst_58 = arith.constant dense<0.000000e+00> : vector<8x16xf32>
    %135 = tpu.matmul %134, %118, %cst_58 {dimension_numbers = #tpu.dot_dimension_numbers<[1], [0], [0], [1], [0, 0, 1, 1], [], []>} : vector<8x16xbf16>, vector<16x16xbf16>, vector<8x16xf32> -> vector<8x16xf32>
    %136 = vector.extract_strided_slice %45 {offsets = [0, 48], sizes = [8, 16], strides = [1, 1]} : vector<8x64xf32> to vector<8x16xf32>
    %137 = arith.truncf %136 : vector<8x16xf32> to vector<8x16xbf16>
    %138 = vector.extract_strided_slice %71 {offsets = [0, 16], sizes = [16, 16], strides = [1, 1]} : vector<16x32xbf16> to vector<16x16xbf16>
    %139 = vector.extract_strided_slice %72 {offsets = [0, 16], sizes = [16, 16], strides = [1, 1]} : vector<16x32xbf16> to vector<16x16xbf16>
    %cst_59 = arith.constant dense<0.000000e+00> : vector<8x16xf32>
    %140 = tpu.matmul %137, %138, %cst_59 {dimension_numbers = #tpu.dot_dimension_numbers<[1], [1], [0], [0], [0, 0, 1, 0], [], []>} : vector<8x16xbf16>, vector<16x16xbf16>, vector<8x16xf32> -> vector<8x16xf32>
    %cst_60 = arith.constant 2.500000e-01 : f32
    %141 = vector.broadcast %cst_60 : f32 to vector<8x16xf32>
    %142 = arith.mulf %140, %141 : vector<8x16xf32>
    %cst_61 = arith.constant -1.000000e+30 : f32
    %143 = vector.broadcast %cst_61 : f32 to vector<8x16xf32>
    %144 = arith.select %70, %142, %143 : vector<8x16xi1>, vector<8x16xf32>
    %cst_62 = arith.constant dense<0xFF800000> : vector<8xf32>
    %145 = vector.multi_reduction <maximumf>, %144, %cst_62 [1] : vector<8x16xf32> to vector<8xf32>
    %146 = vector.shape_cast %145 : vector<8xf32> to vector<8x1xf32>
    %147 = vector.broadcast %146 : vector<8x1xf32> to vector<8x16xf32>
    %148 = arith.subf %144, %147 : vector<8x16xf32>
    %149 = math.exp %148 : vector<8x16xf32>
    %cst_63 = arith.constant dense<0.000000e+00> : vector<8xf32>
    %150 = vector.multi_reduction <add>, %149, %cst_63 [1] : vector<8x16xf32> to vector<8xf32>
    %151 = vector.shape_cast %150 : vector<8xf32> to vector<8x1xf32>
    %152 = tpu.reciprocal %151 {approx = true} : vector<8x1xf32> -> vector<8x1xf32>
    %153 = vector.broadcast %152 : vector<8x1xf32> to vector<8x16xf32>
    %154 = arith.mulf %149, %153 : vector<8x16xf32>
    %155 = arith.truncf %154 : vector<8x16xf32> to vector<8x16xbf16>
    %cst_64 = arith.constant dense<0.000000e+00> : vector<8x16xf32>
    %156 = tpu.matmul %155, %139, %cst_64 {dimension_numbers = #tpu.dot_dimension_numbers<[1], [0], [0], [1], [0, 0, 1, 1], [], []>} : vector<8x16xbf16>, vector<16x16xbf16>, vector<8x16xf32> -> vector<8x16xf32>
    %157 = tpu.concatenate %93, %114, %135, %156 in 1 : vector<8x16xf32>, vector<8x16xf32>, vector<8x16xf32>, vector<8x16xf32> -> vector<8x64xf32>
    %158 = arith.truncf %157 : vector<8x64xf32> to vector<8x64xbf16>
    %c0_65 = arith.constant 0 : index
    %c0_66 = arith.constant 0 : index
    %159 = vector.load %arg5[%c0_65, %c0_66] : memref<64x64xbf16, #tpu.memory_space<vmem>>, vector<64x64xbf16>
    %cst_67 = arith.constant dense<0.000000e+00> : vector<8x64xf32>
    %160 = tpu.matmul %158, %159, %cst_67 {dimension_numbers = #tpu.dot_dimension_numbers<[1], [0], [0], [1], [0, 0, 1, 1], [], []>} : vector<8x64xbf16>, vector<64x64xbf16>, vector<8x64xf32> -> vector<8x64xf32>
    %161 = arith.addf %1, %160 : vector<8x64xf32>
    %162 = arith.mulf %161, %161 : vector<8x64xf32>
    %cst_68 = arith.constant dense<0.000000e+00> : vector<8xf32>
    %163 = vector.multi_reduction <add>, %162, %cst_68 [1] : vector<8x64xf32> to vector<8xf32>
    %164 = vector.shape_cast %163 : vector<8xf32> to vector<8x1xf32>
    %cst_69 = arith.constant 6.400000e+01 : f32
    %165 = vector.broadcast %cst_69 : f32 to vector<8x1xf32>
    %166 = arith.divf %164, %165 : vector<8x1xf32>
    %cst_70 = arith.constant 9.99999974E-6 : f32
    %167 = vector.broadcast %cst_70 : f32 to vector<8x1xf32>
    %168 = arith.addf %166, %167 : vector<8x1xf32>
    %169 = math.rsqrt %168 : vector<8x1xf32>
    %170 = vector.broadcast %169 : vector<8x1xf32> to vector<8x64xf32>
    %171 = arith.mulf %161, %170 : vector<8x64xf32>
    %c0_71 = arith.constant 0 : index
    %c0_72 = arith.constant 0 : index
    %172 = vector.load %arg3[%c0_71, %c0_72] : memref<1x64xf32, #tpu.memory_space<vmem>>, vector<1x64xf32>
    %173 = vector.broadcast %172 : vector<1x64xf32> to vector<8x64xf32>
    %174 = arith.mulf %171, %173 : vector<8x64xf32>
    %175 = arith.truncf %174 : vector<8x64xf32> to vector<8x64xbf16>
    %c0_73 = arith.constant 0 : index
    %c0_74 = arith.constant 0 : index
    %176 = vector.load %arg6[%c0_73, %c0_74] : memref<64x384xbf16, #tpu.memory_space<vmem>>, vector<64x384xbf16>
    %cst_75 = arith.constant dense<0.000000e+00> : vector<8x384xf32>
    %177 = tpu.matmul %175, %176, %cst_75 {dimension_numbers = #tpu.dot_dimension_numbers<[1], [0], [0], [1], [0, 0, 1, 1], [], []>} : vector<8x64xbf16>, vector<64x384xbf16>, vector<8x384xf32> -> vector<8x384xf32>
    %178 = vector.extract_strided_slice %177 {offsets = [0, 0], sizes = [8, 192], strides = [1, 1]} : vector<8x384xf32> to vector<8x192xf32>
    %179 = vector.extract_strided_slice %177 {offsets = [0, 192], sizes = [8, 192], strides = [1, 1]} : vector<8x384xf32> to vector<8x192xf32>
    %180 = arith.negf %178 : vector<8x192xf32>
    %181 = math.exp %180 : vector<8x192xf32>
    %cst_76 = arith.constant 1.000000e+00 : f32
    %182 = vector.broadcast %cst_76 : f32 to vector<8x192xf32>
    %183 = arith.addf %182, %181 : vector<8x192xf32>
    %184 = arith.divf %182, %183 : vector<8x192xf32>
    %185 = arith.mulf %178, %184 : vector<8x192xf32>
    %186 = arith.mulf %185, %179 : vector<8x192xf32>
    %187 = arith.truncf %186 : vector<8x192xf32> to vector<8x192xbf16>
    %c0_77 = arith.constant 0 : index
    %c0_78 = arith.constant 0 : index
    %188 = vector.load %arg7[%c0_77, %c0_78] : memref<192x64xbf16, #tpu.memory_space<vmem>>, vector<192x64xbf16>
    %cst_79 = arith.constant dense<0.000000e+00> : vector<8x64xf32>
    %189 = tpu.matmul %187, %188, %cst_79 {dimension_numbers = #tpu.dot_dimension_numbers<[1], [0], [0], [1], [0, 0, 1, 1], [], []>} : vector<8x192xbf16>, vector<192x64xbf16>, vector<8x64xf32> -> vector<8x64xf32>
    %190 = arith.addf %161, %189 : vector<8x64xf32>
    %c0_80 = arith.constant 0 : index
    %c0_81 = arith.constant 0 : index
    %c0_82 = arith.constant 0 : index
    %191 = vector.load %arg12[%c0_80, %c0_81, %c0_82] : memref<1x8x64xf32, #tpu.memory_space<vmem>>, vector<1x8x64xf32>
    %192 = vector.shape_cast %191 : vector<1x8x64xf32> to vector<8x64xf32>
    %193 = vector.shape_cast %190 : vector<8x64xf32> to vector<1x8x64xf32>
    tpu.vector_store %arg12[%c0_80, %c0_81, %c0_82], %193 {strides = array<i32>} : memref<1x8x64xf32, #tpu.memory_space<vmem>>, vector<1x8x64xf32>,
    return
  }
  func.func @transform_0(%arg0: i32) -> (i32, i32, i32) {
    %c0_i32 = arith.constant 0 : i32
    %c0_i32_0 = arith.constant 0 : i32
    %c0_i32_1 = arith.constant 0 : i32
    return %arg0, %c0_i32, %c0_i32_0 : i32, i32, i32
  }
  func.func @transform_1(%arg0: i32) -> (i32, i32) {
    %c0_i32 = arith.constant 0 : i32
    %c0_i32_0 = arith.constant 0 : i32
    %c0_i32_1 = arith.constant 0 : i32
    return %c0_i32, %c0_i32_0 : i32, i32
  }
  func.func @transform_2(%arg0: i32) -> (i32, i32) {
    %c0_i32 = arith.constant 0 : i32
    %c0_i32_0 = arith.constant 0 : i32
    %c0_i32_1 = arith.constant 0 : i32
    return %c0_i32, %c0_i32_0 : i32, i32
  }
  func.func @transform_3(%arg0: i32) -> (i32, i32) {
    %c0_i32 = arith.constant 0 : i32
    %c0_i32_0 = arith.constant 0 : i32
    %c0_i32_1 = arith.constant 0 : i32
    return %c0_i32, %c0_i32_0 : i32, i32
  }
  func.func @transform_4(%arg0: i32) -> (i32, i32) {
    %c0_i32 = arith.constant 0 : i32
    %c0_i32_0 = arith.constant 0 : i32
    %c0_i32_1 = arith.constant 0 : i32
    return %c0_i32, %c0_i32_0 : i32, i32
  }
  func.func @transform_5(%arg0: i32) -> (i32, i32) {
    %c0_i32 = arith.constant 0 : i32
    %c0_i32_0 = arith.constant 0 : i32
    %c0_i32_1 = arith.constant 0 : i32
    return %c0_i32, %c0_i32_0 : i32, i32
  }
  func.func @transform_6(%arg0: i32) -> (i32, i32) {
    %c0_i32 = arith.constant 0 : i32
    %c0_i32_0 = arith.constant 0 : i32
    %c0_i32_1 = arith.constant 0 : i32
    return %c0_i32, %c0_i32_0 : i32, i32
  }
  func.func @transform_7(%arg0: i32) -> (i32, i32) {
    %c0_i32 = arith.constant 0 : i32
    %c0_i32_0 = arith.constant 0 : i32
    %c0_i32_1 = arith.constant 0 : i32
    return %c0_i32, %c0_i32_0 : i32, i32
  }
  func.func @transform_8(%arg0: i32) -> (i32, i32) {
    %c0_i32 = arith.constant 0 : i32
    %c0_i32_0 = arith.constant 0 : i32
    %c0_i32_1 = arith.constant 0 : i32
    return %c0_i32, %c0_i32_0 : i32, i32
  }
  func.func @transform_9(%arg0: i32) -> (i32, i32, i32) {
    %c0_i32 = arith.constant 0 : i32
    %c0_i32_0 = arith.constant 0 : i32
    %c0_i32_1 = arith.constant 0 : i32
    return %arg0, %c0_i32, %c0_i32_0 : i32, i32, i32
  }
  func.func @transform_10(%arg0: i32) -> (i32, i32, i32) {
    %c0_i32 = arith.constant 0 : i32
    %c0_i32_0 = arith.constant 0 : i32
    %c0_i32_1 = arith.constant 0 : i32
    return %arg0, %c0_i32, %c0_i32_0 : i32, i32, i32
  }
  func.func @transform_11(%arg0: i32) -> (i32, i32, i32) {
    %c0_i32 = arith.constant 0 : i32
    %c0_i32_0 = arith.constant 0 : i32
    %c0_i32_1 = arith.constant 0 : i32
    return %arg0, %c0_i32, %c0_i32_0 : i32, i32, i32
  }
  func.func @transform_12(%arg0: i32) -> (i32, i32, i32) {
    %c0_i32 = arith.constant 0 : i32
    %c0_i32_0 = arith.constant 0 : i32
    %c0_i32_1 = arith.constant 0 : i32
    return %arg0, %c0_i32, %c0_i32_0 : i32, i32, i32
  }
  func.func @transform_13(%arg0: i32) -> (i32, i32, i32) {
    %c0_i32 = arith.constant 0 : i32
    %c0_i32_0 = arith.constant 0 : i32
    %c0_i32_1 = arith.constant 0 : i32
    return %arg0, %c0_i32, %c0_i32_0 : i32, i32, i32
  }
}

</mosaic_0001>

<llo_original>
// kernel: tpu_custom_call.1
$region0: #{tpu_custom_call.1}
  #allocation0 [shape = 'u32[]', space=smem, size = 0x4, offset = 0x4, fixed_abs, tag = 'smem constant byte address 0x4 - core index']
  #allocation1 [shape = 'u32[144,128]{1,0:T(1,128)}', space=vmem, size = 0x12000, scoped, tag = 'internal scratch']
  %s0 = inlined_call_operand.vmem [shape: f32[2,8,64], index: 0, kind: input, shape index: {}]
  %s1 = inlined_call_operand.vmem [shape: f32[1,64], index: 1, kind: input, shape index: {}]
  %s2 = inlined_call_operand.vmem [shape: f32[1,64], index: 2, kind: input, shape index: {}]
  %s3 = inlined_call_operand.vmem [shape: bf16[64,128], index: 3, kind: input, shape index: {}]
  %s4 = inlined_call_operand.vmem [shape: bf16[64,64], index: 4, kind: input, shape index: {}]
  %s5 = inlined_call_operand.vmem [shape: bf16[64,384], index: 5, kind: input, shape index: {}]
  %s6 = inlined_call_operand.vmem [shape: bf16[192,64], index: 6, kind: input, shape index: {}]
  %s7 = inlined_call_operand.vmem [shape: f32[8,128], index: 7, kind: input, shape index: {}]
  %s8 = inlined_call_operand.vmem [shape: f32[8,128], index: 8, kind: input, shape index: {}]
  %s9 = inlined_call_operand.hbm [shape: f32[4,16,32], index: 9, kind: input, shape index: {}, may-alias: {9,12}]
  %s10 = inlined_call_operand.hbm [shape: f32[4,16,32], index: 10, kind: input, shape index: {}, may-alias: {10,13}]
  %s11 = inlined_call_operand.hbm [shape: f32[2,8,64], index: 11, kind: output, shape index: {0}]
  %s12 = inlined_call_operand.hbm [shape: f32[4,16,32], index: 12, kind: output, shape index: {1}, may-alias: {9,12}]
  %s13 = inlined_call_operand.hbm [shape: f32[4,16,32], index: 13, kind: output, shape index: {2}, may-alias: {10,13}]
  %14 = xla_tuple %s11, %s12, %s13
  %s15 = sld [smem:[#allocation0]]
  $region101: #{tpu_custom_call.1} parent=0
    _
  %s17 = ssub.s32 1, %s15
  %s18 = scalar_select 0, %s17, %s15
  $region1: #{tpu_custom_call.1} parent=0
    #allocation2 [shape = 'u8[16384]{0}', space=vmem, size = 0x4000, scoped, tag = 'input window, operand 9']
    #allocation3 [shape = 's32[2]{0}', space=sflag, size = 0x8, scoped, tag = 'scoped memory for tpu_custom_call.1']
    #allocation4 [shape = 's32[2]{0}', space=sflag, size = 0x8, scoped, tag = 'scoped memory for tpu_custom_call.1']
    #allocation5 [shape = 'u8[16384]{0}', space=vmem, size = 0x4000, scoped, tag = 'input window, operand 10']
    #allocation6 [shape = 's32[2]{0}', space=sflag, size = 0x8, scoped, tag = 'scoped memory for tpu_custom_call.1']
    #allocation7 [shape = 'u8[8192]{0}', space=vmem, size = 0x2000, scoped, tag = 'output window, operand 0']
    #allocation8 [shape = 'u8[16384]{0}', space=vmem, size = 0x4000, scoped, tag = 'output window, operand 1']
    #allocation9 [shape = 's32[2]{0}', space=sflag, size = 0x8, scoped, tag = 'scoped memory for tpu_custom_call.1']
    #allocation10 [shape = 'u8[16384]{0}', space=vmem, size = 0x4000, scoped, tag = 'output window, operand 2']
    %19 = vsyncpa [#allocation3], 0
    %s20 = scalar_lea.sflag [#allocation3], 1
    %21 = vsyncpa %s20, 0
    %22 = vsyncpa [#allocation6], 0
    %s23 = scalar_lea.sflag [#allocation6], 1
    %24 = vsyncpa %s23, 0
    %25 = vsyncpa [#allocation4], 0
    %s26 = scalar_lea.sflag [#allocation4], 1
    %27 = vsyncpa %s26, 0
    %28 = vsyncpa [#allocation9], 0
    %s29 = scalar_lea.sflag [#allocation9], 1
    %30 = vsyncpa %s29, 0
    loop: start=0, step=1, limit=4
    $region2: #{tpu_custom_call.1} parent=1 // loop_pre_header
      _
    $region3: #{tpu_custom_call.1} parent=1 // loop_header
      %s32 = sphi 0, %s36
      %p33 = scmp.ge.s32.totalorder %s32, 4
      %s42 = sphi 0, %s44
      %s45 = sphi 0, %s42
      %s46 = sphi 0, %s45
      %s62 = sphi 0, %s46
      %s66 = sphi 0, %s66
      %s68 = sphi 0, %s66
      %s69 = sphi 0, %s68
      %s83 = sphi 0, %s69
      %s87 = sphi 0, %s87
      %s89 = sphi 0, %s87
      %s90 = sphi 0, %s89
      %s104 = sphi 0, %s90
      %s108 = sphi 0, %s108
      %s110 = sphi 0, %s108
      %s111 = sphi 0, %s110
      %s125 = sphi 0, %s111
      %s129 = sphi 0, %s129
      %s131 = sphi 0, %s129
      %s132 = sphi 0, %s131
      %s146 = sphi 0, %s132
      %s150 = sphi 0, %s150
      %s152 = sphi 0, %s150
      %s153 = sphi 0, %s152
      %s167 = sphi 0, %s153
      %s171 = sphi 0, %s171
      %s173 = sphi 0, %s171
      %s174 = sphi 0, %s173
      %s188 = sphi 0, %s174
      %s192 = sphi 0, %s192
      %s194 = sphi 0, %s192
      %s195 = sphi 0, %s194
      %s209 = sphi 0, %s195
      %s213 = sphi 0, %s213
      %s215 = sphi 0, %s213
      %s216 = sphi 0, %s215
      %s230 = sphi 0, %s216
      %s236 = sphi 0, %s238
      %s239 = sphi 0, %s236
      %s240 = sphi 0, %s239
      %s256 = sphi 0, %s240
      %s262 = sphi 0, %s264
      %s265 = sphi 0, %s262
      %s266 = sphi 0, %s265
      %s282 = sphi 0, %s266
      %s288 = sphi 0, %s290
      %s291 = sphi 0, %s288
      %s292 = sphi 0, %s291
      %s308 = sphi 0, %s292
      %s314 = sphi 0, %s316
      %s317 = sphi 0, %s314
      %s318 = sphi 0, %s317
      %s334 = sphi 0, %s318
      %s340 = sphi 0, %s342
      %s343 = sphi 0, %s340
      %s344 = sphi 0, %s343
      %s360 = sphi 0, %s344
    $region4: #{tpu_custom_call.1} parent=1 // loop_header_branch
      %35 = sbr.rel (%p33) target = $region8
    $region5: #{tpu_custom_call.1} parent=1 // loop_body
      %s37 = ssub.s32 %s32, 1
      %s38 = ssub.s32 %s32, 2
      %s39 = sadd.s32 %s32, 1
      %s40 = ssub.s32 %s32, %s39
      %p41 = scmp.eq.s32.totalorder %s40, 0
      %s43 = sadd.s32 %s42, 1
      %s44 = scalar_select %p41, %s42, %s43
      %p47 = pneg %p41
      %p48 = scmp.eq.s32.totalorder %s32, 1
      %p49 = por %p47, %p48
      %p50 = scmp.ne.s32.totalorder %s42, %s45
      %p51 = scmp.eq.s32.totalorder %s32, 0
      %p52 = por %p50, %p51
      %p53 = scmp.ne.s32.totalorder %s42, %s45
      %p54 = scmp.eq.s32.totalorder %s37, 1
      %p55 = por %p53, %p54
      %p56 = scmp.ne.s32.totalorder %s45, %s46
      %p57 = scmp.eq.s32.totalorder %s37, 0
      %p58 = por %p56, %p57
      %p59 = scmp.ne.s32.totalorder %s45, %s46
      %p60 = scmp.eq.s32.totalorder %s38, 1
      %p61 = por %p59, %p60
      %p63 = scmp.ne.s32.totalorder %s46, %s62
      %p64 = scmp.eq.s32.totalorder %s38, 0
      %p65 = por %p63, %p64
      %s67 = sadd.s32 %s66, 1
      %p70 = scmp.eq.s32.totalorder %s32, 1
      %p71 = scmp.ne.s32.totalorder %s66, %s68
      %p72 = scmp.eq.s32.totalorder %s32, 0
      %p73 = por %p71, %p72
      %p74 = scmp.ne.s32.totalorder %s66, %s68
      %p75 = scmp.eq.s32.totalorder %s37, 1
      %p76 = por %p74, %p75
      %p77 = scmp.ne.s32.totalorder %s68, %s69
      %p78 = scmp.eq.s32.totalorder %s37, 0
      %p79 = por %p77, %p78
      %p80 = scmp.ne.s32.totalorder %s68, %s69
      %p81 = scmp.eq.s32.totalorder %s38, 1
      %p82 = por %p80, %p81
      %p84 = scmp.ne.s32.totalorder %s69, %s83
      %p85 = scmp.eq.s32.totalorder %s38, 0
      %p86 = por %p84, %p85
      %s88 = sadd.s32 %s87, 1
      %p91 = scmp.eq.s32.totalorder %s32, 1
      %p92 = scmp.ne.s32.totalorder %s87, %s89
      %p93 = scmp.eq.s32.totalorder %s32, 0
      %p94 = por %p92, %p93
      %p95 = scmp.ne.s32.totalorder %s87, %s89
      %p96 = scmp.eq.s32.totalorder %s37, 1
      %p97 = por %p95, %p96
      %p98 = scmp.ne.s32.totalorder %s89, %s90
      %p99 = scmp.eq.s32.totalorder %s37, 0
      %p100 = por %p98, %p99
      %p101 = scmp.ne.s32.totalorder %s89, %s90
      %p102 = scmp.eq.s32.totalorder %s38, 1
      %p103 = por %p101, %p102
      %p105 = scmp.ne.s32.totalorder %s90, %s104
      %p106 = scmp.eq.s32.totalorder %s38, 0
      %p107 = por %p105, %p106
      %s109 = sadd.s32 %s108, 1
      %p112 = scmp.eq.s32.totalorder %s32, 1
      %p113 = scmp.ne.s32.totalorder %s108, %s110
      %p114 = scmp.eq.s32.totalorder %s32, 0
      %p115 = por %p113, %p114
      %p116 = scmp.ne.s32.totalorder %s108, %s110
      %p117 = scmp.eq.s32.totalorder %s37, 1
      %p118 = por %p116, %p117
      %p119 = scmp.ne.s32.totalorder %s110, %s111
      %p120 = scmp.eq.s32.totalorder %s37, 0
      %p121 = por %p119, %p120
      %p122 = scmp.ne.s32.totalorder %s110, %s111
      %p123 = scmp.eq.s32.totalorder %s38, 1
      %p124 = por %p122, %p123
      %p126 = scmp.ne.s32.totalorder %s111, %s125
      %p127 = scmp.eq.s32.totalorder %s38, 0
      %p128 = por %p126, %p127
      %s130 = sadd.s32 %s129, 1
      %p133 = scmp.eq.s32.totalorder %s32, 1
      %p134 = scmp.ne.s32.totalorder %s129, %s131
      %p135 = scmp.eq.s32.totalorder %s32, 0
      %p136 = por %p134, %p135
      %p137 = scmp.ne.s32.totalorder %s129, %s131
      %p138 = scmp.eq.s32.totalorder %s37, 1
      %p139 = por %p137, %p138
      %p140 = scmp.ne.s32.totalorder %s131, %s132
      %p141 = scmp.eq.s32.totalorder %s37, 0
      %p142 = por %p140, %p141
      %p143 = scmp.ne.s32.totalorder %s131, %s132
      %p144 = scmp.eq.s32.totalorder %s38, 1
      %p145 = por %p143, %p144
      %p147 = scmp.ne.s32.totalorder %s132, %s146
      %p148 = scmp.eq.s32.totalorder %s38, 0
      %p149 = por %p147, %p148
      %s151 = sadd.s32 %s150, 1
      %p154 = scmp.eq.s32.totalorder %s32, 1
      %p155 = scmp.ne.s32.totalorder %s150, %s152
      %p156 = scmp.eq.s32.totalorder %s32, 0
      %p157 = por %p155, %p156
      %p158 = scmp.ne.s32.totalorder %s150, %s152
      %p159 = scmp.eq.s32.totalorder %s37, 1
      %p160 = por %p158, %p159
      %p161 = scmp.ne.s32.totalorder %s152, %s153
      %p162 = scmp.eq.s32.totalorder %s37, 0
      %p163 = por %p161, %p162
      %p164 = scmp.ne.s32.totalorder %s152, %s153
      %p165 = scmp.eq.s32.totalorder %s38, 1
      %p166 = por %p164, %p165
      %p168 = scmp.ne.s32.totalorder %s153, %s167
      %p169 = scmp.eq.s32.totalorder %s38, 0
      %p170 = por %p168, %p169
      %s172 = sadd.s32 %s171, 1
      %p175 = scmp.eq.s32.totalorder %s32, 1
      %p176 = scmp.ne.s32.totalorder %s171, %s173
      %p177 = scmp.eq.s32.totalorder %s32, 0
      %p178 = por %p176, %p177
      %p179 = scmp.ne.s32.totalorder %s171, %s173
      %p180 = scmp.eq.s32.totalorder %s37, 1
      %p181 = por %p179, %p180
      %p182 = scmp.ne.s32.totalorder %s173, %s174
      %p183 = scmp.eq.s32.totalorder %s37, 0
      %p184 = por %p182, %p183
      %p185 = scmp.ne.s32.totalorder %s173, %s174
      %p186 = scmp.eq.s32.totalorder %s38, 1
      %p187 = por %p185, %p186
      %p189 = scmp.ne.s32.totalorder %s174, %s188
      %p190 = scmp.eq.s32.totalorder %s38, 0
      %p191 = por %p189, %p190
      %s193 = sadd.s32 %s192, 1
      %p196 = scmp.eq.s32.totalorder %s32, 1
      %p197 = scmp.ne.s32.totalorder %s192, %s194
      %p198 = scmp.eq.s32.totalorder %s32, 0
      %p199 = por %p197, %p198
      %p200 = scmp.ne.s32.totalorder %s192, %s194
      %p201 = scmp.eq.s32.totalorder %s37, 1
      %p202 = por %p200, %p201
      %p203 = scmp.ne.s32.totalorder %s194, %s195
      %p204 = scmp.eq.s32.totalorder %s37, 0
      %p205 = por %p203, %p204
      %p206 = scmp.ne.s32.totalorder %s194, %s195
      %p207 = scmp.eq.s32.totalorder %s38, 1
      %p208 = por %p206, %p207
      %p210 = scmp.ne.s32.totalorder %s195, %s209
      %p211 = scmp.eq.s32.totalorder %s38, 0
      %p212 = por %p210, %p211
      %s214 = sadd.s32 %s213, 1
      %p217 = scmp.eq.s32.totalorder %s32, 1
      %p218 = scmp.ne.s32.totalorder %s213, %s215
      %p219 = scmp.eq.s32.totalorder %s32, 0
      %p220 = por %p218, %p219
      %p221 = scmp.ne.s32.totalorder %s213, %s215
      %p222 = scmp.eq.s32.totalorder %s37, 1
      %p223 = por %p221, %p222
      %p224 = scmp.ne.s32.totalorder %s215, %s216
      %p225 = scmp.eq.s32.totalorder %s37, 0
      %p226 = por %p224, %p225
      %p227 = scmp.ne.s32.totalorder %s215, %s216
      %p228 = scmp.eq.s32.totalorder %s38, 1
      %p229 = por %p227, %p228
      %p231 = scmp.ne.s32.totalorder %s216, %s230
      %p232 = scmp.eq.s32.totalorder %s38, 0
      %p233 = por %p231, %p232
      %s234 = ssub.s32 %s32, %s39
      %p235 = scmp.eq.s32.totalorder %s234, 0
      %s237 = sadd.s32 %s236, 1
      %s238 = scalar_select %p235, %s236, %s237
      %p241 = pneg %p235
      %p242 = scmp.eq.s32.totalorder %s32, 1
      %p243 = por %p241, %p242
      %p244 = scmp.ne.s32.totalorder %s236, %s239
      %p245 = scmp.eq.s32.totalorder %s32, 0
      %p246 = por %p244, %p245
      %p247 = scmp.ne.s32.totalorder %s236, %s239
      %p248 = scmp.eq.s32.totalorder %s37, 1
      %p249 = por %p247, %p248
      %p250 = scmp.ne.s32.totalorder %s239, %s240
      %p251 = scmp.eq.s32.totalorder %s37, 0
      %p252 = por %p250, %p251
      %p253 = scmp.ne.s32.totalorder %s239, %s240
      %p254 = scmp.eq.s32.totalorder %s38, 1
      %p255 = por %p253, %p254
      %p257 = scmp.ne.s32.totalorder %s240, %s256
      %p258 = scmp.eq.s32.totalorder %s38, 0
      %p259 = por %p257, %p258
      %s260 = ssub.s32 %s32, %s39
      %p261 = scmp.eq.s32.totalorder %s260, 0
      %s263 = sadd.s32 %s262, 1
      %s264 = scalar_select %p261, %s262, %s263
      %p267 = pneg %p261
      %p268 = scmp.eq.s32.totalorder %s32, 1
      %p269 = por %p267, %p268
      %p270 = scmp.ne.s32.totalorder %s262, %s265
      %p271 = scmp.eq.s32.totalorder %s32, 0
      %p272 = por %p270, %p271
      %p273 = scmp.ne.s32.totalorder %s262, %s265
      %p274 = scmp.eq.s32.totalorder %s37, 1
      %p275 = por %p273, %p274
      %p276 = scmp.ne.s32.totalorder %s265, %s266
      %p277 = scmp.eq.s32.totalorder %s37, 0
      %p278 = por %p276, %p277
      %p279 = scmp.ne.s32.totalorder %s265, %s266
      %p280 = scmp.eq.s32.totalorder %s38, 1
      %p281 = por %p279, %p280
      %p283 = scmp.ne.s32.totalorder %s266, %s282
      %p284 = scmp.eq.s32.totalorder %s38, 0
      %p285 = por %p283, %p284
      %s286 = ssub.s32 %s32, %s39
      %p287 = scmp.eq.s32.totalorder %s286, 0
      %s289 = sadd.s32 %s288, 1
      %s290 = scalar_select %p287, %s288, %s289
      %p293 = pneg %p287
      %p294 = scmp.eq.s32.totalorder %s32, 1
      %p295 = por %p293, %p294
      %p296 = scmp.ne.s32.totalorder %s288, %s291
      %p297 = scmp.eq.s32.totalorder %s32, 0
      %p298 = por %p296, %p297
      %p299 = scmp.ne.s32.totalorder %s288, %s291
      %p300 = scmp.eq.s32.totalorder %s37, 1
      %p301 = por %p299, %p300
      %p302 = scmp.ne.s32.totalorder %s291, %s292
      %p303 = scmp.eq.s32.totalorder %s37, 0
      %p304 = por %p302, %p303
      %p305 = scmp.ne.s32.totalorder %s291, %s292
      %p306 = scmp.eq.s32.totalorder %s38, 1
      %p307 = por %p305, %p306
      %p309 = scmp.ne.s32.totalorder %s292, %s308
      %p310 = scmp.eq.s32.totalorder %s38, 0
      %p311 = por %p309, %p310
      %s312 = ssub.s32 %s32, %s39
      %p313 = scmp.eq.s32.totalorder %s312, 0
      %s315 = sadd.s32 %s314, 1
      %s316 = scalar_select %p313, %s314, %s315
      %p319 = pneg %p313
      %p320 = scmp.eq.s32.totalorder %s32, 1
      %p321 = por %p319, %p320
      %p322 = scmp.ne.s32.totalorder %s314, %s317
      %p323 = scmp.eq.s32.totalorder %s32, 0
      %p324 = por %p322, %p323
      %p325 = scmp.ne.s32.totalorder %s314, %s317
      %p326 = scmp.eq.s32.totalorder %s37, 1
      %p327 = por %p325, %p326
      %p328 = scmp.ne.s32.totalorder %s317, %s318
      %p329 = scmp.eq.s32.totalorder %s37, 0
      %p330 = por %p328, %p329
      %p331 = scmp.ne.s32.totalorder %s317, %s318
      %p332 = scmp.eq.s32.totalorder %s38, 1
      %p333 = por %p331, %p332
      %p335 = scmp.ne.s32.totalorder %s318, %s334
      %p336 = scmp.eq.s32.totalorder %s38, 0
      %p337 = por %p335, %p336
      %s338 = ssub.s32 %s32, %s39
      %p339 = scmp.eq.s32.totalorder %s338, 0
      %s341 = sadd.s32 %s340, 1
      %s342 = scalar_select %p339, %s340, %s341
      %p345 = pneg %p339
      %p346 = scmp.eq.s32.totalorder %s32, 1
      %p347 = por %p345, %p346
      %p348 = scmp.ne.s32.totalorder %s340, %s343
      %p349 = scmp.eq.s32.totalorder %s32, 0
      %p350 = por %p348, %p349
      %p351 = scmp.ne.s32.totalorder %s340, %s343
      %p352 = scmp.eq.s32.totalorder %s37, 1
      %p353 = por %p351, %p352
      %p354 = scmp.ne.s32.totalorder %s343, %s344
      %p355 = scmp.eq.s32.totalorder %s37, 0
      %p356 = por %p354, %p355
      %p357 = scmp.ne.s32.totalorder %s343, %s344
      %p358 = scmp.eq.s32.totalorder %s38, 1
      %p359 = por %p357, %p358
      %p361 = scmp.ne.s32.totalorder %s344, %s360
      %p362 = scmp.eq.s32.totalorder %s38, 0
      %p363 = por %p361, %p362
      %p364 = scmp.le.s32.totalorder 1, %s32
      %p365 = scmp.lt.s32.totalorder %s32, 3
      %p366 = pnand %p364, %p365
      %p367 = pneg %p366
      // Predicated region
      $region9: #{tpu_custom_call.1} parent=5 // pred_check
        _
      $region10: #{tpu_custom_call.1} parent=5 // pred_check_branch
        %369 = sbr.rel (%p366) target = $region12
      $region11: #{tpu_custom_call.1} parent=5 // pred_region
        %s370 = ssub.s32 %s32, 1
        // Predicated region
        $region13: #{tpu_custom_call.1} parent=11 // pred_check
          %p371 = pneg %p79
        $region14: #{tpu_custom_call.1} parent=11 // pred_check_branch
          %373 = sbr.rel (%p371) target = $region16
        $region15: #{tpu_custom_call.1} parent=11 // pred_region
          _
        $region16: #{tpu_custom_call.1} parent=11 // pred_fallthru
          _
        // Predicated region
        $region17: #{tpu_custom_call.1} parent=11 // pred_check
          %p374 = pneg %p100
        $region18: #{tpu_custom_call.1} parent=11 // pred_check_branch
          %376 = sbr.rel (%p374) target = $region20
        $region19: #{tpu_custom_call.1} parent=11 // pred_region
          _
        $region20: #{tpu_custom_call.1} parent=11 // pred_fallthru
          _
        // Predicated region
        $region21: #{tpu_custom_call.1} parent=11 // pred_check
          %p377 = pneg %p121
        $region22: #{tpu_custom_call.1} parent=11 // pred_check_branch
          %379 = sbr.rel (%p377) target = $region24
        $region23: #{tpu_custom_call.1} parent=11 // pred_region
          _
        $region24: #{tpu_custom_call.1} parent=11 // pred_fallthru
          _
        // Predicated region
        $region25: #{tpu_custom_call.1} parent=11 // pred_check
          %p380 = pneg %p142
        $region26: #{tpu_custom_call.1} parent=11 // pred_check_branch
          %382 = sbr.rel (%p380) target = $region28
        $region27: #{tpu_custom_call.1} parent=11 // pred_region
          _
        $region28: #{tpu_custom_call.1} parent=11 // pred_fallthru
          _
        // Predicated region
        $region29: #{tpu_custom_call.1} parent=11 // pred_check
          %p383 = pneg %p163
        $region30: #{tpu_custom_call.1} parent=11 // pred_check_branch
          %385 = sbr.rel (%p383) target = $region32
        $region31: #{tpu_custom_call.1} parent=11 // pred_region
          _
        $region32: #{tpu_custom_call.1} parent=11 // pred_fallthru
          _
        // Predicated region
        $region33: #{tpu_custom_call.1} parent=11 // pred_check
          %p386 = pneg %p184
        $region34: #{tpu_custom_call.1} parent=11 // pred_check_branch
          %388 = sbr.rel (%p386) target = $region36
        $region35: #{tpu_custom_call.1} parent=11 // pred_region
          _
        $region36: #{tpu_custom_call.1} parent=11 // pred_fallthru
          _
        // Predicated region
        $region37: #{tpu_custom_call.1} parent=11 // pred_check
          %p389 = pneg %p205
        $region38: #{tpu_custom_call.1} parent=11 // pred_check_branch
          %391 = sbr.rel (%p389) target = $region40
        $region39: #{tpu_custom_call.1} parent=11 // pred_region
          _
        $region40: #{tpu_custom_call.1} parent=11 // pred_fallthru
          _
        // Predicated region
        $region41: #{tpu_custom_call.1} parent=11 // pred_check
          %p392 = pneg %p226
        $region42: #{tpu_custom_call.1} parent=11 // pred_check_branch
          %394 = sbr.rel (%p392) target = $region44
        $region43: #{tpu_custom_call.1} parent=11 // pred_region
          _
        $region44: #{tpu_custom_call.1} parent=11 // pred_fallthru
          _
      $region12: #{tpu_custom_call.1} parent=5 // pred_fallthru
        _
      %p395 = scmp.lt.s32.totalorder %s32, 2
      // Predicated region
      $region45: #{tpu_custom_call.1} parent=5 // pred_check
        %p396 = pneg %p395
      $region46: #{tpu_custom_call.1} parent=5 // pred_check_branch
        %398 = sbr.rel (%p396) target = $region48
      $region47: #{tpu_custom_call.1} parent=5 // pred_region
        // Predicated region
        $region49: #{tpu_custom_call.1} parent=47 // pred_check
          %p399 = pneg %p52
        $region50: #{tpu_custom_call.1} parent=47 // pred_check_branch
          %401 = sbr.rel (%p399) target = $region52
        $region51: #{tpu_custom_call.1} parent=47 // pred_region
          %p402 = scmp.lt.s32.totalorder %s32, 1
          %s403 = scalar_select %p402, %s32, 1
          %s404 = smul.addr %s403, 8
          %s405 = scalar_lea.vmem %s0, %s404
        $region52: #{tpu_custom_call.1} parent=47 // pred_fallthru
          _
        // Predicated region
        $region53: #{tpu_custom_call.1} parent=47 // pred_check
          %p406 = pneg %p246
        $region54: #{tpu_custom_call.1} parent=47 // pred_check_branch
          %408 = sbr.rel (%p406) target = $region56
        $region55: #{tpu_custom_call.1} parent=47 // pred_region
          %s409 = sand.u32 %s236, 1
          %s410 = scalar_lea.sflag [#allocation3], %s409
          %s411 = sand.u32 %s236, 1
          %s412 = smul.addr %s411, 16
          %s413 = scalar_lea.vmem [#allocation2], %s412
          %s415 = ssub.s32 256, 256
          %416 = vsyncadd %s410, %s415
          %s417 = smul.addr %s32, 2
          %s418 = smul.addr %s417, 128
          %s419 = scalar_lea.hbm %s9, %s418
          %s420 = sshll.u32 %s413, 4
          %s421 = int_to_ptr.vmem [resolvable:$true] %s420
          %426 = dma.hbm_to_vmem [thread:$0]  %s419, 256, %s421, %s410, 128, 128, 8
        $region56: #{tpu_custom_call.1} parent=47 // pred_fallthru
          _
        // Predicated region
        $region57: #{tpu_custom_call.1} parent=47 // pred_check
          %p427 = pneg %p272
        $region58: #{tpu_custom_call.1} parent=47 // pred_check_branch
          %429 = sbr.rel (%p427) target = $region60
        $region59: #{tpu_custom_call.1} parent=47 // pred_region
          %s430 = sand.u32 %s262, 1
          %s431 = scalar_lea.sflag [#allocation6], %s430
          %s432 = sand.u32 %s262, 1
          %s433 = smul.addr %s432, 16
          %s434 = scalar_lea.vmem [#allocation5], %s433
          %s436 = ssub.s32 256, 256
          %437 = vsyncadd %s431, %s436
          %s438 = smul.addr %s32, 2
          %s439 = smul.addr %s438, 128
          %s440 = scalar_lea.hbm %s10, %s439
          %s441 = sshll.u32 %s434, 4
          %s442 = int_to_ptr.vmem [resolvable:$true] %s441
          %447 = dma.hbm_to_vmem [thread:$0]  %s440, 256, %s442, %s431, 128, 128, 8
        $region60: #{tpu_custom_call.1} parent=47 // pred_fallthru
          _
      $region48: #{tpu_custom_call.1} parent=5 // pred_fallthru
        _
      %p448 = scmp.le.s32.totalorder 1, %s32
      %p449 = scmp.lt.s32.totalorder %s32, 3
      %p450 = pnand %p448, %p449
      %p451 = pneg %p450
      // Predicated region
      $region61: #{tpu_custom_call.1} parent=5 // pred_check
        _
      $region62: #{tpu_custom_call.1} parent=5 // pred_check_branch
        %453 = sbr.rel (%p450) target = $region64
      $region63: #{tpu_custom_call.1} parent=5 // pred_region
        %s454 = ssub.s32 %s32, 1
        %s455 = sand.u32 %s239, 1
        %s456 = scalar_lea.sflag [#allocation3], %s455
        %s457 = sand.u32 %s239, 1
        %s458 = smul.addr %s457, 16
        %s459 = scalar_lea.vmem [#allocation2], %s458
        // Predicated region
        $region65: #{tpu_custom_call.1} parent=63 // pred_check
          %p460 = pneg %p252
        $region66: #{tpu_custom_call.1} parent=63 // pred_check_branch
          %462 = sbr.rel (%p460) target = $region68
        $region67: #{tpu_custom_call.1} parent=63 // pred_region
          %463 = dma.done %s456, 256
        $region68: #{tpu_custom_call.1} parent=63 // pred_fallthru
          _
        %s464 = sand.u32 %s265, 1
        %s465 = scalar_lea.sflag [#allocation6], %s464
        %s466 = sand.u32 %s265, 1
        %s467 = smul.addr %s466, 16
        %s468 = scalar_lea.vmem [#allocation5], %s467
        // Predicated region
        $region69: #{tpu_custom_call.1} parent=63 // pred_check
          %p469 = pneg %p278
        $region70: #{tpu_custom_call.1} parent=63 // pred_check_branch
          %471 = sbr.rel (%p469) target = $region72
        $region71: #{tpu_custom_call.1} parent=63 // pred_region
          %472 = dma.done %s465, 256
        $region72: #{tpu_custom_call.1} parent=63 // pred_fallthru
          _
        %p473 = scmp.lt.s32.totalorder %s37, 1
        %s474 = scalar_select %p473, %s37, 1
        %s475 = smul.addr %s474, 8
        %s476 = scalar_lea.vmem %s0, %s475
        %p477 = pneg %p58
        %p478 = pneg %p55
        %p479 = pneg %p79
        %p480 = pneg %p76
        %p481 = pneg %p100
        %p482 = pneg %p97
        %p483 = pneg %p121
        %p484 = pneg %p118
        %p485 = pneg %p142
        %p486 = pneg %p139
        %p487 = pneg %p163
        %p488 = pneg %p160
        %p489 = pneg %p184
        %p490 = pneg %p181
        %p491 = pneg %p205
        %p492 = pneg %p202
        %p493 = pneg %p226
        %p494 = pneg %p223
        %s495 = sand.u32 %s239, 1
        %s496 = scalar_lea.sflag [#allocation3], %s495
        %s497 = sand.u32 %s239, 1
        %s498 = smul.addr %s497, 16
        %s499 = scalar_lea.vmem [#allocation2], %s498
        %p500 = pneg %p252
        %p501 = pneg %p249
        %s502 = sand.u32 %s265, 1
        %s503 = scalar_lea.sflag [#allocation6], %s502
        %s504 = sand.u32 %s265, 1
        %s505 = smul.addr %s504, 16
        %s506 = scalar_lea.vmem [#allocation5], %s505
        %p507 = pneg %p278
        %p508 = pneg %p275
        %p509 = pneg %p304
        %p510 = pneg %p301
        %s511 = sand.u32 %s291, 1
        %s512 = scalar_lea.sflag [#allocation4], %s511
        %s513 = sand.u32 %s291, 1
        %s514 = smul.addr %s513, 8
        %s515 = scalar_lea.vmem [#allocation7], %s514
        %p516 = pneg %p330
        %p517 = pneg %p327
        %s518 = sand.u32 %s37, 1
        %s519 = scalar_lea.sflag [#allocation9], %s518
        %s520 = sand.u32 %s317, 1
        %s521 = smul.addr %s520, 16
        %s522 = scalar_lea.vmem [#allocation8], %s521
        %p523 = pneg %p356
        %p524 = pneg %p353
        %s525 = sand.u32 %s37, 1
        %s526 = scalar_lea.sflag [#allocation9], %s525
        %s527 = sand.u32 %s343, 1
        %s528 = smul.addr %s527, 16
        %s529 = scalar_lea.vmem [#allocation10], %s528
        %p530 = scmp.lt.s32.totalorder %s37, 1
        %s531 = scalar_select %p530, %s37, 1
        %s532 = smul.addr %s531, 8
        %s533 = scalar_lea.vmem %s0, %s532
        %v535 = vld [vmem:[%s533] sm:$0xff]
        %v536 = vmul.f32 %v535, %v535
        %vm537 = vcmask 523264
        %v538 = vsel %vm537, %v536, 0.0
        %539 = vadd.xlane.f32.xlu0 %v538
        %v540 = vpop.xlane.xlu0 %539
        %v541 = vrcp.pop 64.0
        %v542 = vmul.f32 %v540, %v541
        %v543 = vadd.f32 %v542, 1e-05
        %v544 = vrsqrt.pop %v543
        %v545 = vmul.f32 %v535, %v544
        %v546 = vld [vmem:[%s1] sm:$0x1]
        %v548 = vlaneseq
        %v549 = vshrl.u32 %v548, 7
        %v550 = vsub.s32 0, %v549
        %v551 = vrot.slane %v546, %v550
        %v553 = vmul.f32 %v545, %v551
        %v554 = vpack.c.bf16 %v553, %v553
        %v555 = vld [vmem:[%s3] sm:$0xf]
        %v556 = vld [vmem:[%s3 + $0x4] sm:$0xf]
        %v557 = vld [vmem:[%s3 + $0x8] sm:$0xf]
        %v558 = vld [vmem:[%s3 + $0xc] sm:$0xf]
        %v559 = vld [vmem:[%s3 + $0x10] sm:$0xf]
        %v560 = vld [vmem:[%s3 + $0x14] sm:$0xf]
        %v561 = vld [vmem:[%s3 + $0x18] sm:$0xf]
        %v562 = vld [vmem:[%s3 + $0x1c] sm:$0xf]
        %v571 = vunpack.c.l.b16 %v555
        %v572 = vunpack.c.l.b16 %v556
        %v573 = vunpack.c.l.b16 %v557
        %v574 = vunpack.c.l.b16 %v558
        %v575 = vunpack.c.l.b16 %v559
        %v576 = vunpack.c.l.b16 %v560
        %v577 = vunpack.c.l.b16 %v561
        %v578 = vunpack.c.l.b16 %v562
        %v579 = vpack.c.b16 %v572, %v571
        %v580 = vpack.c.b16 %v574, %v573
        %v581 = vpack.c.b16 %v576, %v575
        %v582 = vpack.c.b16 %v578, %v577
        %v588 = vsel %vm537, %v554, 0
        %590 = vmatprep.subr.bf16.mxu0 0
        %591 = vmatpush1.bf16.msra.mxu0 %v579
        %592 = vmatprep.subr.bf16.mxu0 0
        %593 = vmatpush1.bf16.msra.mxu0 %v580
        %594 = vmatprep.subr.bf16.mxu0 0
        %595 = vmatpush1.bf16.msra.mxu0 %v581
        %596 = vmatprep.subr.bf16.mxu0 0
        %597 = vmatpush1.bf16.msra.mxu0 %v582
        %598 = vmatprep.subr.bf16.mxu0 0
        %599 = vmatpush1.bf16.msra.mxu0 0
        %600 = vmatprep.subr.bf16.mxu0 0
        %601 = vmatpush1.bf16.msra.mxu0 0
        %602 = vmatprep.subr.bf16.mxu0 0
        %603 = vmatpush1.bf16.msra.mxu0 0
        %604 = vmatprep.subr.bf16.mxu0 0
        %605 = vmatpush1.bf16.msra.mxu0 0
        %606 = vmatprep.subr.bf16.mxu0 0
        %607 = vmatpush1.bf16.msra.mxu0 0
        %608 = vmatprep.subr.bf16.mxu0 0
        %609 = vmatpush1.bf16.msra.mxu0 0
        %610 = vmatprep.subr.bf16.mxu0 0
        %611 = vmatpush1.bf16.msra.mxu0 0
        %612 = vmatprep.subr.bf16.mxu0 0
        %613 = vmatpush1.bf16.msra.mxu0 0
        %614 = vmatprep.subr.bf16.mxu0 0
        %615 = vmatpush1.bf16.msra.mxu0 0
        %616 = vmatprep.subr.bf16.mxu0 0
        %617 = vmatpush1.bf16.msra.mxu0 0
        %618 = vmatprep.subr.bf16.mxu0 0
        %619 = vmatpush1.bf16.msra.mxu0 0
        %620 = vmatprep.subr.bf16.mxu0 0
        %621 = vmatpush1.bf16.msra.mxu0 0
        %622 = vmatprep.mubr.bf16.mxu0 0
        %623 = vmatmul.mubr.bf16.gmra.mrb[0].mxu0 %v588
        %v624 = vpop.f32.mrb[0].mxu0
        %v625 = vadd.f32 0.0, %v624
        %v626 = vpop.f32.mrb[0].mxu0
        %v627 = vpop.f32.mrb[0].mxu0
        %v628 = vpop.f32.mrb[0].mxu0
        %629 = vdwg.mxu0
        %630 = vrot.lane.b32.xlu0 %v625, 127
        %v631 = vpop.permute.xlu0 %630
        %632 = vrot.lane.b32.xlu0 %v625, 1
        %v633 = vpop.permute.xlu0 %632
        %v634 = vlaneseq
        %v635 = vand.u32 %v634, 127
        %vm636 = vcmp.lt.s32.totalorder %v635, 0
        %v637 = vsub.s32 0, %v635
        %v638 = vsel %vm636, %v637, %v635
        %v639 = vshrl.u32 %v638, 1
        %v640 = vand.u32 %v638, 1
        %v641 = vsub.s32 0, %v640
        %v642 = vsel %vm636, %v641, %v640
        %vm643 = vcmp.ne.s32.totalorder %v642, 0
        %vm644 = vcmp.lt.s32.totalorder %v642, 0
        %vm645 = vmand %vm644, %vm643
        %v646 = vadd.s32 %v642, 2
        %v647 = vsel %vm645, %v646, %v642
        %vm648 = vcmp.eq.s32.totalorder %v647, 0
        %v649 = vsel %vm648, %v631, %v633
        %v650 = vld [vmem:[%s7] sm:$0xff]
        %v651 = vmul.f32 %v625, %v650
        %v652 = vld [vmem:[%s8] sm:$0xff]
        %v653 = vmul.f32 %v649, %v652
        %v654 = vadd.f32 %v651, %v653
        %v655 = vld [vmem:[%s459] sm:$0xff]
        %v656 = vld [vmem:[%s459 + $0x8] sm:$0xff]
        %vm657 = vcmask 261120
        %658 = vst.msk [vmem:[%s522] sm:$0xff] %vm657, %v655
        %659 = vst.msk [vmem:[%s522 + $0x8] sm:$0xff] %vm657, %v656
        %v660 = vld [vmem:[%s468] sm:$0xff]
        %v661 = vld [vmem:[%s468 + $0x8] sm:$0xff]
        %662 = vst.msk [vmem:[%s529] sm:$0xff] %vm657, %v660
        %663 = vst.msk [vmem:[%s529 + $0x8] sm:$0xff] %vm657, %v661
        %665 = vrot.lane.b32.xlu0 %v654, 64
        %v666 = vpop.permute.xlu0 %665
        %668 = vst.msk [vmem:[%s522 + $0x3] sm:$0xff] %vm657, %v666
        %670 = vrot.lane.b32.xlu0 %v625, 32
        %v671 = vpop.permute.xlu0 %670
        %673 = vst.msk [vmem:[%s529 + $0x3] sm:$0xff] %vm657, %v671
        %v674 = vld [vmem:[%s522] sm:$0xff]
        %v675 = vld [vmem:[%s522 + $0x8] sm:$0xff]
        %v676 = vld [vmem:[%s529] sm:$0xff]
        %v677 = vld [vmem:[%s529 + $0x8] sm:$0xff]
        %vm678 = vcmp.lt.s32.totalorder %v635, 11
        %v679 = vpack.c.bf16 %v675, %v674
        %v680 = vpack.c.bf16 %v677, %v676
        %v681 = vpack.c.bf16 %v654, %v654
        %vm682 = vcmask 130048
        %v684 = vsel %vm682, %v681, 0
        %v687 = vsel %vm682, %v679, 0
        %689 = vmatprep.subr.bf16.mxu0 0
        %690 = vmatpush1.bf16.xpose.msra.mxu0 %v687
        %691 = vmatprep.subr.bf16.mxu0 0
        %692 = vmatpush1.bf16.xpose.msra.mxu0 0
        %693 = vmatprep.subr.bf16.mxu0 0
        %694 = vmatpush1.bf16.xpose.msra.mxu0 0
        %695 = vmatprep.subr.bf16.mxu0 0
        %696 = vmatpush1.bf16.xpose.msra.mxu0 0
        %697 = vmatprep.subr.bf16.mxu0 0
        %698 = vmatpush1.bf16.xpose.msra.mxu0 0
        %699 = vmatprep.subr.bf16.mxu0 0
        %700 = vmatpush1.bf16.xpose.msra.mxu0 0
        %701 = vmatprep.subr.bf16.mxu0 0
        %702 = vmatpush1.bf16.xpose.msra.mxu0 0
        %703 = vmatprep.subr.bf16.mxu0 0
        %704 = vmatpush1.bf16.xpose.msra.mxu0 0
        %705 = vmatprep.subr.bf16.mxu0 0
        %706 = vmatpush1.bf16.xpose.msra.mxu0 0
        %707 = vmatprep.subr.bf16.mxu0 0
        %708 = vmatpush1.bf16.xpose.msra.mxu0 0
        %709 = vmatprep.subr.bf16.mxu0 0
        %710 = vmatpush1.bf16.xpose.msra.mxu0 0
        %711 = vmatprep.subr.bf16.mxu0 0
        %712 = vmatpush1.bf16.xpose.msra.mxu0 0
        %713 = vmatprep.subr.bf16.mxu0 0
        %714 = vmatpush1.bf16.xpose.msra.mxu0 0
        %715 = vmatprep.subr.bf16.mxu0 0
        %716 = vmatpush1.bf16.xpose.msra.mxu0 0
        %717 = vmatprep.subr.bf16.mxu0 0
        %718 = vmatpush1.bf16.xpose.msra.mxu0 0
        %719 = vmatprep.subr.bf16.mxu0 0
        %720 = vmatpush1.bf16.xpose.msra.mxu0 0
        %721 = vmatprep.mubr.bf16.mxu0 0
        %722 = vmatmul.mubr.bf16.gmra.mrb[0].mxu0 %v684
        %v723 = vpop.f32.mrb[0].mxu0
        %v724 = vadd.f32 0.0, %v723
        %v725 = vpop.f32.mrb[0].mxu0
        %v726 = vpop.f32.mrb[0].mxu0
        %v727 = vpop.f32.mrb[0].mxu0
        %728 = vdwg.mxu0
        %v729 = vmul.f32 %v724, 0.25
        %v730 = vsel %vm678, %v729, -1e+30
        %v731 = vsel %vm682, %v730, -inf
        %732 = vmax.xlane.f32.xlu0 %v731
        %v733 = vpop.xlane.xlu0 %732
        %v734 = vsub.f32 %v730, %v733
        %v735 = vmul.f32 %v734, 1.442695
        %v736 = vpow.pop %v735
        %v737 = vsel %vm682, %v736, 0.0
        %738 = vadd.xlane.f32.xlu0 %v737
        %v739 = vpop.xlane.xlu0 %738
        %v740 = vrcp.pop %v739
        %v741 = vmul.f32 %v736, %v740
        %v742 = vpack.c.bf16 %v741, %v741
        %v744 = vsel %vm682, %v742, 0
        %746 = vmatprep.subr.bf16.mxu0 0
        %747 = vmatpush1.bf16.msra.mxu0 %v680
        %748 = vmatprep.subr.bf16.mxu0 0
        %749 = vmatpush1.bf16.msra.mxu0 0
        %750 = vmatprep.subr.bf16.mxu0 0
        %751 = vmatpush1.bf16.msra.mxu0 0
        %752 = vmatprep.subr.bf16.mxu0 0
        %753 = vmatpush1.bf16.msra.mxu0 0
        %754 = vmatprep.subr.bf16.mxu0 0
        %755 = vmatpush1.bf16.msra.mxu0 0
        %756 = vmatprep.subr.bf16.mxu0 0
        %757 = vmatpush1.bf16.msra.mxu0 0
        %758 = vmatprep.subr.bf16.mxu0 0
        %759 = vmatpush1.bf16.msra.mxu0 0
        %760 = vmatprep.subr.bf16.mxu0 0
        %761 = vmatpush1.bf16.msra.mxu0 0
        %762 = vmatprep.subr.bf16.mxu0 0
        %763 = vmatpush1.bf16.msra.mxu0 0
        %764 = vmatprep.subr.bf16.mxu0 0
        %765 = vmatpush1.bf16.msra.mxu0 0
        %766 = vmatprep.subr.bf16.mxu0 0
        %767 = vmatpush1.bf16.msra.mxu0 0
        %768 = vmatprep.subr.bf16.mxu0 0
        %769 = vmatpush1.bf16.msra.mxu0 0
        %770 = vmatprep.subr.bf16.mxu0 0
        %771 = vmatpush1.bf16.msra.mxu0 0
        %772 = vmatprep.subr.bf16.mxu0 0
        %773 = vmatpush1.bf16.msra.mxu0 0
        %774 = vmatprep.subr.bf16.mxu0 0
        %775 = vmatpush1.bf16.msra.mxu0 0
        %776 = vmatprep.subr.bf16.mxu0 0
        %777 = vmatpush1.bf16.msra.mxu0 0
        %778 = vmatprep.mubr.bf16.mxu0 0
        %779 = vmatmul.mubr.bf16.gmra.mrb[0].mxu0 %v744
        %v780 = vpop.f32.mrb[0].mxu0
        %v781 = vadd.f32 0.0, %v780
        %v782 = vpop.f32.mrb[0].mxu0
        %v783 = vpop.f32.mrb[0].mxu0
        %v784 = vpop.f32.mrb[0].mxu0
        %785 = vdwg.mxu0
        %787 = vrot.lane.b32.xlu0 %v681, 112
        %v788 = vpop.permute.xlu0 %787
        %v790 = vsel %vm682, %v788, 0
        %792 = vmatprep.subr.bf16.mxu0 0
        %793 = vmatpush1.bf16.xpose.msra.mxu0 %v687
        %794 = vmatprep.subr.bf16.mxu0 0
        %795 = vmatpush1.bf16.xpose.msra.mxu0 0
        %796 = vmatprep.subr.bf16.mxu0 0
        %797 = vmatpush1.bf16.xpose.msra.mxu0 0
        %798 = vmatprep.subr.bf16.mxu0 0
        %799 = vmatpush1.bf16.xpose.msra.mxu0 0
        %800 = vmatprep.subr.bf16.mxu0 0
        %801 = vmatpush1.bf16.xpose.msra.mxu0 0
        %802 = vmatprep.subr.bf16.mxu0 0
        %803 = vmatpush1.bf16.xpose.msra.mxu0 0
        %804 = vmatprep.subr.bf16.mxu0 0
        %805 = vmatpush1.bf16.xpose.msra.mxu0 0
        %806 = vmatprep.subr.bf16.mxu0 0
        %807 = vmatpush1.bf16.xpose.msra.mxu0 0
        %808 = vmatprep.subr.bf16.mxu0 0
        %809 = vmatpush1.bf16.xpose.msra.mxu0 0
        %810 = vmatprep.subr.bf16.mxu0 0
        %811 = vmatpush1.bf16.xpose.msra.mxu0 0
        %812 = vmatprep.subr.bf16.mxu0 0
        %813 = vmatpush1.bf16.xpose.msra.mxu0 0
        %814 = vmatprep.subr.bf16.mxu0 0
        %815 = vmatpush1.bf16.xpose.msra.mxu0 0
        %816 = vmatprep.subr.bf16.mxu0 0
        %817 = vmatpush1.bf16.xpose.msra.mxu0 0
        %818 = vmatprep.subr.bf16.mxu0 0
        %819 = vmatpush1.bf16.xpose.msra.mxu0 0
        %820 = vmatprep.subr.bf16.mxu0 0
        %821 = vmatpush1.bf16.xpose.msra.mxu0 0
        %822 = vmatprep.subr.bf16.mxu0 0
        %823 = vmatpush1.bf16.xpose.msra.mxu0 0
        %824 = vmatprep.mubr.bf16.mxu0 0
        %825 = vmatmul.mubr.bf16.gmra.mrb[0].mxu0 %v790
        %v826 = vpop.f32.mrb[0].mxu0
        %v827 = vadd.f32 0.0, %v826
        %v828 = vpop.f32.mrb[0].mxu0
        %v829 = vpop.f32.mrb[0].mxu0
        %v830 = vpop.f32.mrb[0].mxu0
        %831 = vdwg.mxu0
        %v832 = vmul.f32 %v827, 0.25
        %v833 = vsel %vm678, %v832, -1e+30
        %v834 = vsel %vm682, %v833, -inf
        %835 = vmax.xlane.f32.xlu0 %v834
        %v836 = vpop.xlane.xlu0 %835
        %v837 = vsub.f32 %v833, %v836
        %v838 = vmul.f32 %v837, 1.442695
        %v839 = vpow.pop %v838
        %v840 = vsel %vm682, %v839, 0.0
        %841 = vadd.xlane.f32.xlu0 %v840
        %v842 = vpop.xlane.xlu0 %841
        %v843 = vrcp.pop %v842
        %v844 = vmul.f32 %v839, %v843
        %v845 = vpack.c.bf16 %v844, %v844
        %v847 = vsel %vm682, %v845, 0
        %849 = vmatprep.subr.bf16.mxu0 0
        %850 = vmatpush1.bf16.msra.mxu0 %v680
        %851 = vmatprep.subr.bf16.mxu0 0
        %852 = vmatpush1.bf16.msra.mxu0 0
        %853 = vmatprep.subr.bf16.mxu0 0
        %854 = vmatpush1.bf16.msra.mxu0 0
        %855 = vmatprep.subr.bf16.mxu0 0
        %856 = vmatpush1.bf16.msra.mxu0 0
        %857 = vmatprep.subr.bf16.mxu0 0
        %858 = vmatpush1.bf16.msra.mxu0 0
        %859 = vmatprep.subr.bf16.mxu0 0
        %860 = vmatpush1.bf16.msra.mxu0 0
        %861 = vmatprep.subr.bf16.mxu0 0
        %862 = vmatpush1.bf16.msra.mxu0 0
        %863 = vmatprep.subr.bf16.mxu0 0
        %864 = vmatpush1.bf16.msra.mxu0 0
        %865 = vmatprep.subr.bf16.mxu0 0
        %866 = vmatpush1.bf16.msra.mxu0 0
        %867 = vmatprep.subr.bf16.mxu0 0
        %868 = vmatpush1.bf16.msra.mxu0 0
        %869 = vmatprep.subr.bf16.mxu0 0
        %870 = vmatpush1.bf16.msra.mxu0 0
        %871 = vmatprep.subr.bf16.mxu0 0
        %872 = vmatpush1.bf16.msra.mxu0 0
        %873 = vmatprep.subr.bf16.mxu0 0
        %874 = vmatpush1.bf16.msra.mxu0 0
        %875 = vmatprep.subr.bf16.mxu0 0
        %876 = vmatpush1.bf16.msra.mxu0 0
        %877 = vmatprep.subr.bf16.mxu0 0
        %878 = vmatpush1.bf16.msra.mxu0 0
        %879 = vmatprep.subr.bf16.mxu0 0
        %880 = vmatpush1.bf16.msra.mxu0 0
        %881 = vmatprep.mubr.bf16.mxu0 0
        %882 = vmatmul.mubr.bf16.gmra.mrb[0].mxu0 %v847
        %v883 = vpop.f32.mrb[0].mxu0
        %v884 = vadd.f32 0.0, %v883
        %v885 = vpop.f32.mrb[0].mxu0
        %v886 = vpop.f32.mrb[0].mxu0
        %v887 = vpop.f32.mrb[0].mxu0
        %888 = vdwg.mxu0
        %889 = vrot.lane.b32.xlu0 %v681, 96
        %v890 = vpop.permute.xlu0 %889
        %892 = vrot.lane.b32.xlu0 %v679, 112
        %v893 = vpop.permute.xlu0 %892
        %v895 = vsel %vm682, %v890, 0
        %v898 = vsel %vm682, %v893, 0
        %900 = vmatprep.subr.bf16.mxu0 0
        %901 = vmatpush1.bf16.xpose.msra.mxu0 %v898
        %902 = vmatprep.subr.bf16.mxu0 0
        %903 = vmatpush1.bf16.xpose.msra.mxu0 0
        %904 = vmatprep.subr.bf16.mxu0 0
        %905 = vmatpush1.bf16.xpose.msra.mxu0 0
        %906 = vmatprep.subr.bf16.mxu0 0
        %907 = vmatpush1.bf16.xpose.msra.mxu0 0
        %908 = vmatprep.subr.bf16.mxu0 0
        %909 = vmatpush1.bf16.xpose.msra.mxu0 0
        %910 = vmatprep.subr.bf16.mxu0 0
        %911 = vmatpush1.bf16.xpose.msra.mxu0 0
        %912 = vmatprep.subr.bf16.mxu0 0
        %913 = vmatpush1.bf16.xpose.msra.mxu0 0
        %914 = vmatprep.subr.bf16.mxu0 0
        %915 = vmatpush1.bf16.xpose.msra.mxu0 0
        %916 = vmatprep.subr.bf16.mxu0 0
        %917 = vmatpush1.bf16.xpose.msra.mxu0 0
        %918 = vmatprep.subr.bf16.mxu0 0
        %919 = vmatpush1.bf16.xpose.msra.mxu0 0
        %920 = vmatprep.subr.bf16.mxu0 0
        %921 = vmatpush1.bf16.xpose.msra.mxu0 0
        %922 = vmatprep.subr.bf16.mxu0 0
        %923 = vmatpush1.bf16.xpose.msra.mxu0 0
        %924 = vmatprep.subr.bf16.mxu0 0
        %925 = vmatpush1.bf16.xpose.msra.mxu0 0
        %926 = vmatprep.subr.bf16.mxu0 0
        %927 = vmatpush1.bf16.xpose.msra.mxu0 0
        %928 = vmatprep.subr.bf16.mxu0 0
        %929 = vmatpush1.bf16.xpose.msra.mxu0 0
        %930 = vmatprep.subr.bf16.mxu0 0
        %931 = vmatpush1.bf16.xpose.msra.mxu0 0
        %932 = vmatprep.mubr.bf16.mxu0 0
        %933 = vmatmul.mubr.bf16.gmra.mrb[0].mxu0 %v895
        %v934 = vpop.f32.mrb[0].mxu0
        %v935 = vadd.f32 0.0, %v934
        %v936 = vpop.f32.mrb[0].mxu0
        %v937 = vpop.f32.mrb[0].mxu0
        %v938 = vpop.f32.mrb[0].mxu0
        %939 = vdwg.mxu0
        %v940 = vmul.f32 %v935, 0.25
        %v941 = vsel %vm678, %v940, -1e+30
        %v942 = vsel %vm682, %v941, -inf
        %943 = vmax.xlane.f32.xlu0 %v942
        %v944 = vpop.xlane.xlu0 %943
        %v945 = vsub.f32 %v941, %v944
        %v946 = vmul.f32 %v945, 1.442695
        %v947 = vpow.pop %v946
        %v948 = vsel %vm682, %v947, 0.0
        %949 = vadd.xlane.f32.xlu0 %v948
        %v950 = vpop.xlane.xlu0 %949
        %v951 = vrcp.pop %v950
        %v952 = vmul.f32 %v947, %v951
        %v953 = vpack.c.bf16 %v952, %v952
        %955 = vrot.lane.b32.xlu0 %v680, 112
        %v956 = vpop.permute.xlu0 %955
        %v959 = vsel %vm682, %v953, 0
        %961 = vmatprep.subr.bf16.mxu0 0
        %962 = vmatpush1.bf16.msra.mxu0 %v956
        %963 = vmatprep.subr.bf16.mxu0 0
        %964 = vmatpush1.bf16.msra.mxu0 0
        %965 = vmatprep.subr.bf16.mxu0 0
        %966 = vmatpush1.bf16.msra.mxu0 0
        %967 = vmatprep.subr.bf16.mxu0 0
        %968 = vmatpush1.bf16.msra.mxu0 0
        %969 = vmatprep.subr.bf16.mxu0 0
        %970 = vmatpush1.bf16.msra.mxu0 0
        %971 = vmatprep.subr.bf16.mxu0 0
        %972 = vmatpush1.bf16.msra.mxu0 0
        %973 = vmatprep.subr.bf16.mxu0 0
        %974 = vmatpush1.bf16.msra.mxu0 0
        %975 = vmatprep.subr.bf16.mxu0 0
        %976 = vmatpush1.bf16.msra.mxu0 0
        %977 = vmatprep.subr.bf16.mxu0 0
        %978 = vmatpush1.bf16.msra.mxu0 0
        %979 = vmatprep.subr.bf16.mxu0 0
        %980 = vmatpush1.bf16.msra.mxu0 0
        %981 = vmatprep.subr.bf16.mxu0 0
        %982 = vmatpush1.bf16.msra.mxu0 0
        %983 = vmatprep.subr.bf16.mxu0 0
        %984 = vmatpush1.bf16.msra.mxu0 0
        %985 = vmatprep.subr.bf16.mxu0 0
        %986 = vmatpush1.bf16.msra.mxu0 0
        %987 = vmatprep.subr.bf16.mxu0 0
        %988 = vmatpush1.bf16.msra.mxu0 0
        %989 = vmatprep.subr.bf16.mxu0 0
        %990 = vmatpush1.bf16.msra.mxu0 0
        %991 = vmatprep.subr.bf16.mxu0 0
        %992 = vmatpush1.bf16.msra.mxu0 0
        %993 = vmatprep.mubr.bf16.mxu0 0
        %994 = vmatmul.mubr.bf16.gmra.mrb[0].mxu0 %v959
        %v995 = vpop.f32.mrb[0].mxu0
        %v996 = vadd.f32 0.0, %v995
        %v997 = vpop.f32.mrb[0].mxu0
        %v998 = vpop.f32.mrb[0].mxu0
        %v999 = vpop.f32.mrb[0].mxu0
        %1000 = vdwg.mxu0
        %1001 = vrot.lane.b32.xlu0 %v681, 80
        %v1002 = vpop.permute.xlu0 %1001
        %v1004 = vsel %vm682, %v1002, 0
        %1006 = vmatprep.subr.bf16.mxu0 0
        %1007 = vmatpush1.bf16.xpose.msra.mxu0 %v898
        %1008 = vmatprep.subr.bf16.mxu0 0
        %1009 = vmatpush1.bf16.xpose.msra.mxu0 0
        %1010 = vmatprep.subr.bf16.mxu0 0
        %1011 = vmatpush1.bf16.xpose.msra.mxu0 0
        %1012 = vmatprep.subr.bf16.mxu0 0
        %1013 = vmatpush1.bf16.xpose.msra.mxu0 0
        %1014 = vmatprep.subr.bf16.mxu0 0
        %1015 = vmatpush1.bf16.xpose.msra.mxu0 0
        %1016 = vmatprep.subr.bf16.mxu0 0
        %1017 = vmatpush1.bf16.xpose.msra.mxu0 0
        %1018 = vmatprep.subr.bf16.mxu0 0
        %1019 = vmatpush1.bf16.xpose.msra.mxu0 0
        %1020 = vmatprep.subr.bf16.mxu0 0
        %1021 = vmatpush1.bf16.xpose.msra.mxu0 0
        %1022 = vmatprep.subr.bf16.mxu0 0
        %1023 = vmatpush1.bf16.xpose.msra.mxu0 0
        %1024 = vmatprep.subr.bf16.mxu0 0
        %1025 = vmatpush1.bf16.xpose.msra.mxu0 0
        %1026 = vmatprep.subr.bf16.mxu0 0
        %1027 = vmatpush1.bf16.xpose.msra.mxu0 0
        %1028 = vmatprep.subr.bf16.mxu0 0
        %1029 = vmatpush1.bf16.xpose.msra.mxu0 0
        %1030 = vmatprep.subr.bf16.mxu0 0
        %1031 = vmatpush1.bf16.xpose.msra.mxu0 0
        %1032 = vmatprep.subr.bf16.mxu0 0
        %1033 = vmatpush1.bf16.xpose.msra.mxu0 0
        %1034 = vmatprep.subr.bf16.mxu0 0
        %1035 = vmatpush1.bf16.xpose.msra.mxu0 0
        %1036 = vmatprep.subr.bf16.mxu0 0
        %1037 = vmatpush1.bf16.xpose.msra.mxu0 0
        %1038 = vmatprep.mubr.bf16.mxu0 0
        %1039 = vmatmul.mubr.bf16.gmra.mrb[0].mxu0 %v1004
        %v1040 = vpop.f32.mrb[0].mxu0
        %v1041 = vadd.f32 0.0, %v1040
        %v1042 = vpop.f32.mrb[0].mxu0
        %v1043 = vpop.f32.mrb[0].mxu0
        %v1044 = vpop.f32.mrb[0].mxu0
        %1045 = vdwg.mxu0
        %v1046 = vmul.f32 %v1041, 0.25
        %v1047 = vsel %vm678, %v1046, -1e+30
        %v1048 = vsel %vm682, %v1047, -inf
        %1049 = vmax.xlane.f32.xlu0 %v1048
        %v1050 = vpop.xlane.xlu0 %1049
        %v1051 = vsub.f32 %v1047, %v1050
        %v1052 = vmul.f32 %v1051, 1.442695
        %v1053 = vpow.pop %v1052
        %v1054 = vsel %vm682, %v1053, 0.0
        %1055 = vadd.xlane.f32.xlu0 %v1054
        %v1056 = vpop.xlane.xlu0 %1055
        %v1057 = vrcp.pop %v1056
        %v1058 = vmul.f32 %v1053, %v1057
        %v1059 = vpack.c.bf16 %v1058, %v1058
        %v1061 = vsel %vm682, %v1059, 0
        %1063 = vmatprep.subr.bf16.mxu0 0
        %1064 = vmatpush1.bf16.msra.mxu0 %v956
        %1065 = vmatprep.subr.bf16.mxu0 0
        %1066 = vmatpush1.bf16.msra.mxu0 0
        %1067 = vmatprep.subr.bf16.mxu0 0
        %1068 = vmatpush1.bf16.msra.mxu0 0
        %1069 = vmatprep.subr.bf16.mxu0 0
        %1070 = vmatpush1.bf16.msra.mxu0 0
        %1071 = vmatprep.subr.bf16.mxu0 0
        %1072 = vmatpush1.bf16.msra.mxu0 0
        %1073 = vmatprep.subr.bf16.mxu0 0
        %1074 = vmatpush1.bf16.msra.mxu0 0
        %1075 = vmatprep.subr.bf16.mxu0 0
        %1076 = vmatpush1.bf16.msra.mxu0 0
        %1077 = vmatprep.subr.bf16.mxu0 0
        %1078 = vmatpush1.bf16.msra.mxu0 0
        %1079 = vmatprep.subr.bf16.mxu0 0
        %1080 = vmatpush1.bf16.msra.mxu0 0
        %1081 = vmatprep.subr.bf16.mxu0 0
        %1082 = vmatpush1.bf16.msra.mxu0 0
        %1083 = vmatprep.subr.bf16.mxu0 0
        %1084 = vmatpush1.bf16.msra.mxu0 0
        %1085 = vmatprep.subr.bf16.mxu0 0
        %1086 = vmatpush1.bf16.msra.mxu0 0
        %1087 = vmatprep.subr.bf16.mxu0 0
        %1088 = vmatpush1.bf16.msra.mxu0 0
        %1089 = vmatprep.subr.bf16.mxu0 0
        %1090 = vmatpush1.bf16.msra.mxu0 0
        %1091 = vmatprep.subr.bf16.mxu0 0
        %1092 = vmatpush1.bf16.msra.mxu0 0
        %1093 = vmatprep.subr.bf16.mxu0 0
        %1094 = vmatpush1.bf16.msra.mxu0 0
        %1095 = vmatprep.mubr.bf16.mxu0 0
        %1096 = vmatmul.mubr.bf16.gmra.mrb[0].mxu0 %v1061
        %v1097 = vpop.f32.mrb[0].mxu0
        %v1098 = vadd.f32 0.0, %v1097
        %v1099 = vpop.f32.mrb[0].mxu0
        %v1100 = vpop.f32.mrb[0].mxu0
        %v1101 = vpop.f32.mrb[0].mxu0
        %1102 = vdwg.mxu0
        %1104 = vrot.lane.b32.xlu0 %v884, 16
        %v1105 = vpop.permute.xlu0 %1104
        %1108 = vrot.lane.b32.xlu0 %v996, 32
        %v1109 = vpop.permute.xlu0 %1108
        %1112 = vrot.lane.b32.xlu0 %v1098, 48
        %v1113 = vpop.permute.xlu0 %1112
        %v1115 = vsel %vm682, %v781, %v1105
        %v1116 = vsel %vm657, %v1115, %v1109
        %vm1117 = vcmask 392192
        %v1118 = vsel %vm1117, %v1116, %v1113
        %v1119 = vpack.c.bf16 %v1118, %v1118
        %v1120 = vld [vmem:[%s4] sm:$0xf]
        %v1121 = vld [vmem:[%s4 + $0x4] sm:$0xf]
        %v1122 = vld [vmem:[%s4 + $0x8] sm:$0xf]
        %v1123 = vld [vmem:[%s4 + $0xc] sm:$0xf]
        %v1124 = vld [vmem:[%s4 + $0x10] sm:$0xf]
        %v1125 = vld [vmem:[%s4 + $0x14] sm:$0xf]
        %v1126 = vld [vmem:[%s4 + $0x18] sm:$0xf]
        %v1127 = vld [vmem:[%s4 + $0x1c] sm:$0xf]
        %v1136 = vunpack.c.l.b16 %v1120
        %v1137 = vunpack.c.l.b16 %v1121
        %v1138 = vunpack.c.l.b16 %v1122
        %v1139 = vunpack.c.l.b16 %v1123
        %v1140 = vunpack.c.l.b16 %v1124
        %v1141 = vunpack.c.l.b16 %v1125
        %v1142 = vunpack.c.l.b16 %v1126
        %v1143 = vunpack.c.l.b16 %v1127
        %v1144 = vpack.c.b16 %v1137, %v1136
        %v1145 = vpack.c.b16 %v1139, %v1138
        %v1146 = vpack.c.b16 %v1141, %v1140
        %v1147 = vpack.c.b16 %v1143, %v1142
        %v1153 = vsel %vm537, %v1119, 0
        %1155 = vmatprep.subr.bf16.mxu0 0
        %1156 = vmatpush1.bf16.msra.mxu0 %v1144
        %1157 = vmatprep.subr.bf16.mxu0 0
        %1158 = vmatpush1.bf16.msra.mxu0 %v1145
        %1159 = vmatprep.subr.bf16.mxu0 0
        %1160 = vmatpush1.bf16.msra.mxu0 %v1146
        %1161 = vmatprep.subr.bf16.mxu0 0
        %1162 = vmatpush1.bf16.msra.mxu0 %v1147
        %1163 = vmatprep.subr.bf16.mxu0 0
        %1164 = vmatpush1.bf16.msra.mxu0 0
        %1165 = vmatprep.subr.bf16.mxu0 0
        %1166 = vmatpush1.bf16.msra.mxu0 0
        %1167 = vmatprep.subr.bf16.mxu0 0
        %1168 = vmatpush1.bf16.msra.mxu0 0
        %1169 = vmatprep.subr.bf16.mxu0 0
        %1170 = vmatpush1.bf16.msra.mxu0 0
        %1171 = vmatprep.subr.bf16.mxu0 0
        %1172 = vmatpush1.bf16.msra.mxu0 0
        %1173 = vmatprep.subr.bf16.mxu0 0
        %1174 = vmatpush1.bf16.msra.mxu0 0
        %1175 = vmatprep.subr.bf16.mxu0 0
        %1176 = vmatpush1.bf16.msra.mxu0 0
        %1177 = vmatprep.subr.bf16.mxu0 0
        %1178 = vmatpush1.bf16.msra.mxu0 0
        %1179 = vmatprep.subr.bf16.mxu0 0
        %1180 = vmatpush1.bf16.msra.mxu0 0
        %1181 = vmatprep.subr.bf16.mxu0 0
        %1182 = vmatpush1.bf16.msra.mxu0 0
        %1183 = vmatprep.subr.bf16.mxu0 0
        %1184 = vmatpush1.bf16.msra.mxu0 0
        %1185 = vmatprep.subr.bf16.mxu0 0
        %1186 = vmatpush1.bf16.msra.mxu0 0
        %1187 = vmatprep.mubr.bf16.mxu0 0
        %1188 = vmatmul.mubr.bf16.gmra.mrb[0].mxu0 %v1153
        %v1189 = vpop.f32.mrb[0].mxu0
        %v1190 = vadd.f32 0.0, %v1189
        %v1191 = vpop.f32.mrb[0].mxu0
        %v1192 = vpop.f32.mrb[0].mxu0
        %v1193 = vpop.f32.mrb[0].mxu0
        %1194 = vdwg.mxu0
        %v1195 = vadd.f32 %v535, %v1190
        %v1196 = vmul.f32 %v1195, %v1195
        %v1197 = vsel %vm537, %v1196, 0.0
        %1198 = vadd.xlane.f32.xlu0 %v1197
        %v1199 = vpop.xlane.xlu0 %1198
        %v1200 = vmul.f32 %v1199, %v541
        %v1201 = vadd.f32 %v1200, 1e-05
        %v1202 = vrsqrt.pop %v1201
        %v1203 = vmul.f32 %v1195, %v1202
        %v1204 = vld [vmem:[%s2] sm:$0x1]
        %v1206 = vlaneseq
        %v1207 = vshrl.u32 %v1206, 7
        %v1208 = vsub.s32 0, %v1207
        %v1209 = vrot.slane %v1204, %v1208
        %v1211 = vmul.f32 %v1203, %v1209
        %v1212 = vpack.c.bf16 %v1211, %v1211
        %v1213 = vld [vmem:[%s5] sm:$0xff]
        %v1214 = vld [vmem:[%s5 + $0x8] sm:$0xf]
        %v1215 = vld [vmem:[%s5 + $0xc] sm:$0xff]
        %v1216 = vld [vmem:[%s5 + $0x14] sm:$0xf]
        %v1217 = vld [vmem:[%s5 + $0x18] sm:$0xff]
        %v1218 = vld [vmem:[%s5 + $0x20] sm:$0xf]
        %v1219 = vld [vmem:[%s5 + $0x24] sm:$0xff]
        %v1220 = vld [vmem:[%s5 + $0x2c] sm:$0xf]
        %v1221 = vld [vmem:[%s5 + $0x30] sm:$0xff]
        %v1222 = vld [vmem:[%s5 + $0x38] sm:$0xf]
        %v1223 = vld [vmem:[%s5 + $0x3c] sm:$0xff]
        %v1224 = vld [vmem:[%s5 + $0x44] sm:$0xf]
        %v1225 = vld [vmem:[%s5 + $0x48] sm:$0xff]
        %v1226 = vld [vmem:[%s5 + $0x50] sm:$0xf]
        %v1227 = vld [vmem:[%s5 + $0x54] sm:$0xff]
        %v1228 = vld [vmem:[%s5 + $0x5c] sm:$0xf]
        %v1245 = vunpack.c.l.b16 %v1213
        %v1246 = vunpack.c.h.b16 %v1213
        %v1247 = vunpack.c.l.b16 %v1214
        %v1248 = vunpack.c.l.b16 %v1215
        %v1249 = vunpack.c.h.b16 %v1215
        %v1250 = vunpack.c.l.b16 %v1216
        %v1251 = vunpack.c.l.b16 %v1217
        %v1252 = vunpack.c.h.b16 %v1217
        %v1253 = vunpack.c.l.b16 %v1218
        %v1254 = vunpack.c.l.b16 %v1219
        %v1255 = vunpack.c.h.b16 %v1219
        %v1256 = vunpack.c.l.b16 %v1220
        %v1257 = vunpack.c.l.b16 %v1221
        %v1258 = vunpack.c.h.b16 %v1221
        %v1259 = vunpack.c.l.b16 %v1222
        %v1260 = vunpack.c.l.b16 %v1223
        %v1261 = vunpack.c.h.b16 %v1223
        %v1262 = vunpack.c.l.b16 %v1224
        %v1263 = vunpack.c.l.b16 %v1225
        %v1264 = vunpack.c.h.b16 %v1225
        %v1265 = vunpack.c.l.b16 %v1226
        %v1266 = vunpack.c.l.b16 %v1227
        %v1267 = vunpack.c.h.b16 %v1227
        %v1268 = vunpack.c.l.b16 %v1228
        %v1269 = vpack.c.b16 %v1248, %v1245
        %v1270 = vpack.c.b16 %v1249, %v1246
        %v1271 = vpack.c.b16 %v1250, %v1247
        %v1272 = vpack.c.b16 %v1254, %v1251
        %v1273 = vpack.c.b16 %v1255, %v1252
        %v1274 = vpack.c.b16 %v1256, %v1253
        %v1275 = vpack.c.b16 %v1260, %v1257
        %v1276 = vpack.c.b16 %v1261, %v1258
        %v1277 = vpack.c.b16 %v1262, %v1259
        %v1278 = vpack.c.b16 %v1266, %v1263
        %v1279 = vpack.c.b16 %v1267, %v1264
        %v1280 = vpack.c.b16 %v1268, %v1265
        %v1294 = vsel %vm537, %v1212, 0
        %1296 = vmatprep.subr.bf16.mxu0 %v1270
        %1297 = vmatpush1.bf16.msra.mxu0 %v1269
        %1298 = vmatprep.subr.bf16.mxu0 %v1273
        %1299 = vmatpush1.bf16.msra.mxu0 %v1272
        %1300 = vmatprep.subr.bf16.mxu0 %v1276
        %1301 = vmatpush1.bf16.msra.mxu0 %v1275
        %1302 = vmatprep.subr.bf16.mxu0 %v1279
        %1303 = vmatpush1.bf16.msra.mxu0 %v1278
        %1304 = vmatprep.subr.bf16.mxu0 0
        %1305 = vmatpush1.bf16.msra.mxu0 0
        %1306 = vmatprep.subr.bf16.mxu0 0
        %1307 = vmatpush1.bf16.msra.mxu0 0
        %1308 = vmatprep.subr.bf16.mxu0 0
        %1309 = vmatpush1.bf16.msra.mxu0 0
        %1310 = vmatprep.subr.bf16.mxu0 0
        %1311 = vmatpush1.bf16.msra.mxu0 0
        %1312 = vmatprep.subr.bf16.mxu0 0
        %1313 = vmatpush1.bf16.msra.mxu0 0
        %1314 = vmatprep.subr.bf16.mxu0 0
        %1315 = vmatpush1.bf16.msra.mxu0 0
        %1316 = vmatprep.subr.bf16.mxu0 0
        %1317 = vmatpush1.bf16.msra.mxu0 0
        %1318 = vmatprep.subr.bf16.mxu0 0
        %1319 = vmatpush1.bf16.msra.mxu0 0
        %1320 = vmatprep.subr.bf16.mxu0 0
        %1321 = vmatpush1.bf16.msra.mxu0 0
        %1322 = vmatprep.subr.bf16.mxu0 0
        %1323 = vmatpush1.bf16.msra.mxu0 0
        %1324 = vmatprep.subr.bf16.mxu0 0
        %1325 = vmatpush1.bf16.msra.mxu0 0
        %1326 = vmatprep.subr.bf16.mxu0 0
        %1327 = vmatpush1.bf16.msra.mxu0 0
        %1328 = vmatprep.mubr.bf16.mxu0 0
        %1329 = vmatmul.mubr.bf16.gmra.mrb[0].mxu0 %v1294
        %v1330 = vpop.f32.mrb[0].mxu0
        %v1331 = vadd.f32 0.0, %v1330
        %v1332 = vpop.f32.mrb[0].mxu0
        %v1333 = vadd.f32 0.0, %v1332
        %v1334 = vpop.f32.mrb[0].mxu0
        %v1335 = vpop.f32.mrb[0].mxu0
        %1336 = vdwg.mxu0
        %1337 = vmatprep.subr.bf16.mxu0 0
        %1338 = vmatpush1.bf16.msra.mxu0 %v1271
        %1339 = vmatprep.subr.bf16.mxu0 0
        %1340 = vmatpush1.bf16.msra.mxu0 %v1274
        %1341 = vmatprep.subr.bf16.mxu0 0
        %1342 = vmatpush1.bf16.msra.mxu0 %v1277
        %1343 = vmatprep.subr.bf16.mxu0 0
        %1344 = vmatpush1.bf16.msra.mxu0 %v1280
        %1345 = vmatprep.subr.bf16.mxu0 0
        %1346 = vmatpush1.bf16.msra.mxu0 0
        %1347 = vmatprep.subr.bf16.mxu0 0
        %1348 = vmatpush1.bf16.msra.mxu0 0
        %1349 = vmatprep.subr.bf16.mxu0 0
        %1350 = vmatpush1.bf16.msra.mxu0 0
        %1351 = vmatprep.subr.bf16.mxu0 0
        %1352 = vmatpush1.bf16.msra.mxu0 0
        %1353 = vmatprep.subr.bf16.mxu0 0
        %1354 = vmatpush1.bf16.msra.mxu0 0
        %1355 = vmatprep.subr.bf16.mxu0 0
        %1356 = vmatpush1.bf16.msra.mxu0 0
        %1357 = vmatprep.subr.bf16.mxu0 0
        %1358 = vmatpush1.bf16.msra.mxu0 0
        %1359 = vmatprep.subr.bf16.mxu0 0
        %1360 = vmatpush1.bf16.msra.mxu0 0
        %1361 = vmatprep.subr.bf16.mxu0 0
        %1362 = vmatpush1.bf16.msra.mxu0 0
        %1363 = vmatprep.subr.bf16.mxu0 0
        %1364 = vmatpush1.bf16.msra.mxu0 0
        %1365 = vmatprep.subr.bf16.mxu0 0
        %1366 = vmatpush1.bf16.msra.mxu0 0
        %1367 = vmatprep.subr.bf16.mxu0 0
        %1368 = vmatpush1.bf16.msra.mxu0 0
        %1369 = vmatprep.mubr.bf16.mxu0 0
        %1370 = vmatmul.mubr.bf16.gmra.mrb[0].mxu0 %v1294
        %v1371 = vpop.f32.mrb[0].mxu0
        %v1372 = vadd.f32 0.0, %v1371
        %v1373 = vpop.f32.mrb[0].mxu0
        %v1374 = vpop.f32.mrb[0].mxu0
        %v1375 = vpop.f32.mrb[0].mxu0
        %1376 = vdwg.mxu0
        %v1377 = vxor.u32 %v1331, 2147483648
        %v1378 = vxor.u32 %v1333, 2147483648
        %v1379 = vmul.f32 %v1377, 1.442695
        %v1380 = vpow.pop %v1379
        %v1381 = vmul.f32 %v1378, 1.442695
        %v1382 = vpow.pop %v1381
        %v1383 = vadd.f32 %v1380, 1.0
        %v1384 = vadd.f32 %v1382, 1.0
        %v1385 = vrcp.pop %v1383
        %v1386 = vmul.f32 1.0, %v1385
        %v1387 = vrcp.pop %v1384
        %v1388 = vmul.f32 1.0, %v1387
        %v1389 = vmul.f32 %v1331, %v1386
        %v1390 = vmul.f32 %v1333, %v1388
        %1393 = vrot.lane.b32.xlu0 %v1333, 64
        %v1394 = vpop.permute.xlu0 %1393
        %1395 = vrot.lane.b32.xlu0 %v1372, 64
        %v1396 = vpop.permute.xlu0 %1395
        %v1397 = vsel %vm537, %v1394, %v1396
        %v1400 = vmul.f32 %v1389, %v1397
        %v1401 = vmul.f32 %v1390, %v1396
        %v1402 = vpack.c.bf16 %v1400, %v1400
        %v1403 = vpack.c.bf16 %v1401, %v1401
        %v1404 = vld [vmem:[%s6] sm:$0xf]
        %v1405 = vld [vmem:[%s6 + $0x4] sm:$0xf]
        %v1406 = vld [vmem:[%s6 + $0x8] sm:$0xf]
        %v1407 = vld [vmem:[%s6 + $0xc] sm:$0xf]
        %v1408 = vld [vmem:[%s6 + $0x10] sm:$0xf]
        %v1409 = vld [vmem:[%s6 + $0x14] sm:$0xf]
        %v1410 = vld [vmem:[%s6 + $0x18] sm:$0xf]
        %v1411 = vld [vmem:[%s6 + $0x1c] sm:$0xf]
        %v1412 = vld [vmem:[%s6 + $0x20] sm:$0xf]
        %v1413 = vld [vmem:[%s6 + $0x24] sm:$0xf]
        %v1414 = vld [vmem:[%s6 + $0x28] sm:$0xf]
        %v1415 = vld [vmem:[%s6 + $0x2c] sm:$0xf]
        %v1416 = vld [vmem:[%s6 + $0x30] sm:$0xf]
        %v1417 = vld [vmem:[%s6 + $0x34] sm:$0xf]
        %v1418 = vld [vmem:[%s6 + $0x38] sm:$0xf]
        %v1419 = vld [vmem:[%s6 + $0x3c] sm:$0xf]
        %v1420 = vld [vmem:[%s6 + $0x40] sm:$0xf]
        %v1421 = vld [vmem:[%s6 + $0x44] sm:$0xf]
        %v1422 = vld [vmem:[%s6 + $0x48] sm:$0xf]
        %v1423 = vld [vmem:[%s6 + $0x4c] sm:$0xf]
        %v1424 = vld [vmem:[%s6 + $0x50] sm:$0xf]
        %v1425 = vld [vmem:[%s6 + $0x54] sm:$0xf]
        %v1426 = vld [vmem:[%s6 + $0x58] sm:$0xf]
        %v1427 = vld [vmem:[%s6 + $0x5c] sm:$0xf]
        %v1452 = vunpack.c.l.b16 %v1404
        %v1453 = vunpack.c.l.b16 %v1405
        %v1454 = vunpack.c.l.b16 %v1406
        %v1455 = vunpack.c.l.b16 %v1407
        %v1456 = vunpack.c.l.b16 %v1408
        %v1457 = vunpack.c.l.b16 %v1409
        %v1458 = vunpack.c.l.b16 %v1410
        %v1459 = vunpack.c.l.b16 %v1411
        %v1460 = vunpack.c.l.b16 %v1412
        %v1461 = vunpack.c.l.b16 %v1413
        %v1462 = vunpack.c.l.b16 %v1414
        %v1463 = vunpack.c.l.b16 %v1415
        %v1464 = vunpack.c.l.b16 %v1416
        %v1465 = vunpack.c.l.b16 %v1417
        %v1466 = vunpack.c.l.b16 %v1418
        %v1467 = vunpack.c.l.b16 %v1419
        %v1468 = vunpack.c.l.b16 %v1420
        %v1469 = vunpack.c.l.b16 %v1421
        %v1470 = vunpack.c.l.b16 %v1422
        %v1471 = vunpack.c.l.b16 %v1423
        %v1472 = vunpack.c.l.b16 %v1424
        %v1473 = vunpack.c.l.b16 %v1425
        %v1474 = vunpack.c.l.b16 %v1426
        %v1475 = vunpack.c.l.b16 %v1427
        %v1476 = vpack.c.b16 %v1453, %v1452
        %v1477 = vpack.c.b16 %v1455, %v1454
        %v1478 = vpack.c.b16 %v1457, %v1456
        %v1479 = vpack.c.b16 %v1459, %v1458
        %v1480 = vpack.c.b16 %v1461, %v1460
        %v1481 = vpack.c.b16 %v1463, %v1462
        %v1482 = vpack.c.b16 %v1465, %v1464
        %v1483 = vpack.c.b16 %v1467, %v1466
        %v1484 = vpack.c.b16 %v1469, %v1468
        %v1485 = vpack.c.b16 %v1471, %v1470
        %v1486 = vpack.c.b16 %v1473, %v1472
        %v1487 = vpack.c.b16 %v1475, %v1474
        %v1501 = vsel %vm537, %v1403, 0
        %1503 = vmatprep.subr.bf16.mxu0 0
        %1504 = vmatpush1.bf16.msra.mxu0 %v1476
        %1505 = vmatprep.subr.bf16.mxu0 0
        %1506 = vmatpush1.bf16.msra.mxu0 %v1477
        %1507 = vmatprep.subr.bf16.mxu0 0
        %1508 = vmatpush1.bf16.msra.mxu0 %v1478
        %1509 = vmatprep.subr.bf16.mxu0 0
        %1510 = vmatpush1.bf16.msra.mxu0 %v1479
        %1511 = vmatprep.subr.bf16.mxu0 0
        %1512 = vmatpush1.bf16.msra.mxu0 %v1480
        %1513 = vmatprep.subr.bf16.mxu0 0
        %1514 = vmatpush1.bf16.msra.mxu0 %v1481
        %1515 = vmatprep.subr.bf16.mxu0 0
        %1516 = vmatpush1.bf16.msra.mxu0 %v1482
        %1517 = vmatprep.subr.bf16.mxu0 0
        %1518 = vmatpush1.bf16.msra.mxu0 %v1483
        %1519 = vmatprep.subr.bf16.mxu0 0
        %1520 = vmatpush1.bf16.msra.mxu0 %v1484
        %1521 = vmatprep.subr.bf16.mxu0 0
        %1522 = vmatpush1.bf16.msra.mxu0 %v1485
        %1523 = vmatprep.subr.bf16.mxu0 0
        %1524 = vmatpush1.bf16.msra.mxu0 %v1486
        %1525 = vmatprep.subr.bf16.mxu0 0
        %1526 = vmatpush1.bf16.msra.mxu0 %v1487
        %1527 = vmatprep.subr.bf16.mxu0 0
        %1528 = vmatpush1.bf16.msra.mxu0 0
        %1529 = vmatprep.subr.bf16.mxu0 0
        %1530 = vmatpush1.bf16.msra.mxu0 0
        %1531 = vmatprep.subr.bf16.mxu0 0
        %1532 = vmatpush1.bf16.msra.mxu0 0
        %1533 = vmatprep.subr.bf16.mxu0 0
        %1534 = vmatpush1.bf16.msra.mxu0 0
        %1535 = vmatprep.mubr.bf16.mxu0 %v1501
        %1536 = vmatmul.mubr.bf16.gmra.mrb[0].mxu0 %v1402
        %v1537 = vpop.f32.mrb[0].mxu0
        %v1538 = vadd.f32 0.0, %v1537
        %v1539 = vpop.f32.mrb[0].mxu0
        %v1540 = vpop.f32.mrb[0].mxu0
        %v1541 = vpop.f32.mrb[0].mxu0
        %1542 = vdwg.mxu0
        %v1543 = vadd.f32 %v1195, %v1538
        %1544 = vst.msk [vmem:[%s515] sm:$0xff] %vm537, %v1543
        %s1545 = sand.u32 %s291, 1
        %s1546 = scalar_lea.sflag [#allocation4], %s1545
        %s1547 = sand.u32 %s291, 1
        %s1548 = smul.addr %s1547, 8
        %s1549 = scalar_lea.vmem [#allocation7], %s1548
        %s1550 = sand.u32 %s37, 1
        %s1551 = scalar_lea.sflag [#allocation9], %s1550
        %s1552 = sand.u32 %s317, 1
        %s1553 = smul.addr %s1552, 16
        %s1554 = scalar_lea.vmem [#allocation8], %s1553
        %s1555 = sand.u32 %s37, 1
        %s1556 = scalar_lea.sflag [#allocation9], %s1555
        %s1557 = sand.u32 %s343, 1
        %s1558 = smul.addr %s1557, 16
        %s1559 = scalar_lea.vmem [#allocation10], %s1558
        // Predicated region
        $region73: #{tpu_custom_call.1} parent=63 // pred_check
          %p1560 = pneg %p301
        $region74: #{tpu_custom_call.1} parent=63 // pred_check_branch
          %1562 = sbr.rel (%p1560) target = $region76
        $region75: #{tpu_custom_call.1} parent=63 // pred_region
          %s1564 = ssub.s32 128, 128
          %1565 = vsyncadd %s1546, %s1564
          %s1566 = smul.addr %s37, 128
          %s1567 = scalar_lea.hbm %s11, %s1566
          %s1569 = sshll.u32 %s1549, 4
          %s1570 = int_to_ptr.vmem [resolvable:$true] %s1569
          %1572 = dma.vmem_to_hbm [thread:$0]  %s1570, 128, %s1567, %s1546
        $region76: #{tpu_custom_call.1} parent=63 // pred_fallthru
          _
        // Predicated region
        $region77: #{tpu_custom_call.1} parent=63 // pred_check
          %p1573 = pneg %p327
        $region78: #{tpu_custom_call.1} parent=63 // pred_check_branch
          %1575 = sbr.rel (%p1573) target = $region80
        $region79: #{tpu_custom_call.1} parent=63 // pred_region
          %s1577 = ssub.s32 256, 256
          %1578 = vsyncadd %s1551, %s1577
          %s1579 = smul.addr %s37, 2
          %s1580 = smul.addr %s1579, 128
          %s1581 = scalar_lea.hbm %s12, %s1580
          %s1582 = sshll.u32 %s1554, 4
          %s1583 = int_to_ptr.vmem [resolvable:$true] %s1582
          %1588 = dma.vmem_to_hbm [thread:$0]  %s1583, 256, %s1581, %s1551, 128, 128, 8
        $region80: #{tpu_custom_call.1} parent=63 // pred_fallthru
          _
        // Predicated region
        $region81: #{tpu_custom_call.1} parent=63 // pred_check
          %p1589 = pneg %p353
        $region82: #{tpu_custom_call.1} parent=63 // pred_check_branch
          %1591 = sbr.rel (%p1589) target = $region84
        $region83: #{tpu_custom_call.1} parent=63 // pred_region
          %s1593 = ssub.s32 256, 256
          %1594 = vsyncadd %s1556, %s1593
          %s1595 = smul.addr %s37, 2
          %s1596 = smul.addr %s1595, 128
          %s1597 = scalar_lea.hbm %s13, %s1596
          %s1598 = sshll.u32 %s1559, 4
          %s1599 = int_to_ptr.vmem [resolvable:$true] %s1598
          %1604 = dma.vmem_to_hbm [thread:$0]  %s1599, 256, %s1597, %s1556, 128, 128, 8
        $region84: #{tpu_custom_call.1} parent=63 // pred_fallthru
          _
      $region64: #{tpu_custom_call.1} parent=5 // pred_fallthru
        _
      %p1605 = scmp.le.s32.totalorder 2, %s32
      // Predicated region
      $region85: #{tpu_custom_call.1} parent=5 // pred_check
        %p1606 = pneg %p1605
      $region86: #{tpu_custom_call.1} parent=5 // pred_check_branch
        %1608 = sbr.rel (%p1606) target = $region88
      $region87: #{tpu_custom_call.1} parent=5 // pred_region
        %s1609 = ssub.s32 %s32, 2
        // Predicated region
        $region89: #{tpu_custom_call.1} parent=87 // pred_check
          %p1610 = pneg %p307
        $region90: #{tpu_custom_call.1} parent=87 // pred_check_branch
          %1612 = sbr.rel (%p1610) target = $region92
        $region91: #{tpu_custom_call.1} parent=87 // pred_region
          %s1613 = sand.u32 %s292, 1
          %s1614 = scalar_lea.sflag [#allocation4], %s1613
          %s1615 = sand.u32 %s292, 1
          %s1616 = smul.addr %s1615, 8
          %s1617 = scalar_lea.vmem [#allocation7], %s1616
          %1618 = dma.done %s1614, 128
        $region92: #{tpu_custom_call.1} parent=87 // pred_fallthru
          _
        // Predicated region
        $region93: #{tpu_custom_call.1} parent=87 // pred_check
          %p1619 = pneg %p333
        $region94: #{tpu_custom_call.1} parent=87 // pred_check_branch
          %1621 = sbr.rel (%p1619) target = $region96
        $region95: #{tpu_custom_call.1} parent=87 // pred_region
          %s1622 = sand.u32 %s38, 1
          %s1623 = scalar_lea.sflag [#allocation9], %s1622
          %s1624 = sand.u32 %s318, 1
          %s1625 = smul.addr %s1624, 16
          %s1626 = scalar_lea.vmem [#allocation8], %s1625
          %1627 = dma.done %s1623, 256
        $region96: #{tpu_custom_call.1} parent=87 // pred_fallthru
          _
        // Predicated region
        $region97: #{tpu_custom_call.1} parent=87 // pred_check
          %p1628 = pneg %p359
        $region98: #{tpu_custom_call.1} parent=87 // pred_check_branch
          %1630 = sbr.rel (%p1628) target = $region100
        $region99: #{tpu_custom_call.1} parent=87 // pred_region
          %s1631 = sand.u32 %s38, 1
          %s1632 = scalar_lea.sflag [#allocation9], %s1631
          %s1633 = sand.u32 %s344, 1
          %s1634 = smul.addr %s1633, 16
          %s1635 = scalar_lea.vmem [#allocation10], %s1634
          %1636 = dma.done %s1632, 256
        $region100: #{tpu_custom_call.1} parent=87 // pred_fallthru
          _
      $region88: #{tpu_custom_call.1} parent=5 // pred_fallthru
        _
    $region6: #{tpu_custom_call.1} parent=1 // loop_footer
      %s36 = sadd.s32 1, %s32
    $region7: #{tpu_custom_call.1} parent=1 // loop_footer_branch
      %31 = sbr.rel target = $region3
    $region8: #{tpu_custom_call.1} parent=1 // loop_exit
      _
    %1637 = vsyncpa [#allocation3], 1
    %s1638 = scalar_lea.sflag [#allocation3], 1
    %1639 = vsyncpa %s1638, 1
    %1640 = vsyncpa [#allocation6], 1
    %s1641 = scalar_lea.sflag [#allocation6], 1
    %1642 = vsyncpa %s1641, 1
    %1643 = vsyncpa [#allocation4], 1
    %s1644 = scalar_lea.sflag [#allocation4], 1
    %1645 = vsyncpa %s1644, 1
    %1646 = vsyncpa [#allocation9], 1
    %s1647 = scalar_lea.sflag [#allocation9], 1
    %1648 = vsyncpa %s1647, 1

</llo_original>
